<compile_context>
chip_gen: v5e
topology: v5e:2x2
jax: 0.10.0
libtpu: 0.0.40
codegen_flags: <defaults>
</compile_context>

<pallas_src>
from functools import partial

import numpy as np
import jax
import jax.numpy as jnp
from jax.experimental import pallas as pl
from jax.experimental.pallas import tpu as pltpu

# ----------------------------- model dims ---------------------------------
X_SHAPE = (1, 16, 16)                 # x_shape of a single example (C, H, W)
X_DIM = int(np.prod(X_SHAPE))         # 256
Y_DIM = 4                             # number of classes
Z_DIM = 64                            # latent dim (module default)
HIDDEN = 64                           # MLP hidden width
ZS = 2 * Z_DIM                        # 128 = [mu | logvar] width (lane-dense)
LOGIT_PAD = 128                       # classifier head padded to lane-dense width


# ----------------------------- fused kernel --------------------------------
def _sslvae_kernel(x_ref, yoh_ref, eps_ref,
                   wx1_ref, bx1_ref, wc2_ref, bc2_ref, wy1_ref,
                   we2_ref, be2_ref, wd1z_ref, bd1_ref, wd2_ref, bd2_ref,
                   lab_ref, rec_lab_ref, un_pack_ref, rec_un_ref):
    f32, bf16 = jnp.float32, jnp.bfloat16
    bb = x_ref.shape[0]
    xb = x_ref[...]                       # already bf16 (cast in wrapper)
    yoh = yoh_ref[...]

    # ---- fused first layer: x @ [wc1 | we1x] in ONE lane-dense (X_DIM, 128) matmul ----
    xc = jnp.dot(xb, wx1_ref[...], preferred_element_type=f32) + bx1_ref[...]
    hc = jnp.maximum(xc[:, :HIDDEN], 0.0)          # classifier hidden
    xe = xc[:, HIDDEN:]                            # encoder x-term (relu applied later)

    # ---- classifier head (zero-padded to 128 lanes -> lane-dense result) ----
    logits = (jnp.dot(hc.astype(bf16), wc2_ref[...], preferred_element_type=f32)
              + bc2_ref[...])                      # (bb, 128), cols >= Y_DIM are 0

    # ---- fused label embedding: yoh @ [we1y | wd1y] in one (Y_DIM, 128) matmul ----
    wy1 = wy1_ref[...]
    enc_rows, dec_rows = wy1[:, :HIDDEN], wy1[:, HIDDEN:]
    ye = jnp.dot(yoh, wy1, preferred_element_type=f32)
    yenc, ydec = ye[:, :HIDDEN], ye[:, HIDDEN:]

    # ---- stack labelled branch + Y_DIM class branches along sublanes:
    # one-hot @ W is just a row of W, so each class only adds a broadcast row
    # (no x replication); the stacked M runs 3 big matmuls instead of 15 small ones. ----
    h_stack = jnp.concatenate(
        [jnp.maximum(xe + yenc, 0.0)]
        + [jnp.maximum(xe + enc_rows[c:c + 1, :], 0.0) for c in range(Y_DIM)],
        axis=0)                                                     # (5*bb, 64)
    yd_stack = jnp.concatenate(
        [ydec] + [jnp.broadcast_to(dec_rows[c:c + 1, :], (bb, HIDDEN))
                  for c in range(Y_DIM)],
        axis=0)                                                     # (5*bb, 64)
    eps_all = eps_ref[...].reshape((Y_DIM + 1) * bb, Z_DIM)         # [lab, c0..c3]

    # encoder head: fused [mu | logvar] (HIDDEN, 128) matmul
    zs_all = (jnp.dot(h_stack.astype(bf16), we2_ref[...], preferred_element_type=f32)
              + be2_ref[...])                                       # (5*bb, 128)
    mu, logvar = zs_all[:, :Z_DIM], zs_all[:, Z_DIM:]
    z_all = mu + jnp.exp(0.5 * logvar) * eps_all                    # reparameterize (training)

    # decoder (2-layer MLP stand-in; see TODO above)
    hd = jnp.maximum(
        jnp.dot(z_all.astype(bf16), wd1z_ref[...], preferred_element_type=f32)
        + yd_stack + bd1_ref[...], 0.0)
    rec_all = jax.nn.sigmoid(
        jnp.dot(hd.astype(bf16), wd2_ref[...], preferred_element_type=f32) + bd2_ref[...])

    # ---- lane-dense, batch-major stores (no XLA transpose needed in the wrapper) ----
    # labelled slab: [mu | logvar | logits(4)+pad] -> logits ride in spare lanes
    lab_ref[...] = jnp.concatenate([zs_all[:bb], logits], axis=-1)  # (bb, 256) f32
    rec_lab_ref[...] = rec_all[:bb].astype(bf16)
    for c in range(Y_DIM):
        lo, hi = (c + 1) * bb, (c + 2) * bb
        un_pack_ref[:, c * ZS:(c + 1) * ZS] = zs_all[lo:hi]
        rec_un_ref[:, c * X_DIM:(c + 1) * X_DIM] = rec_all[lo:hi].astype(bf16)


# ----------------------------- wrapper --------------------------------------
def _const_spec(shape):
    nd = len(shape)
    return pl.BlockSpec(shape, lambda i, _nd=nd: (0,) * _nd)   # VMEM-resident across steps


def _pad_batch(b):
    """Pick (padded_batch, block) so blocks are large (v5e/v6e HBM roofline) but the
    grid has >= 2 steps when possible (v7x two-TensorCore sharding via 'parallel')."""
    bp = -(-b // 8) * 8
    if bp <= 8:
        return bp, bp
    bb = min(512, max(8, ((bp // 2) // 8) * 8))
    bp = -(-bp // bb) * bb
    return bp, bb


@partial(jax.jit, static_argnames=("bb",))
def _sslvae_core(params, x_pad, yoh_pad, eps, *, bb):
    bp = x_pad.shape[0]
    weights = (params["w_x1"], params["b_x1"], params["wc2"], params["bc2"],
               params["w_y1"], params["we2"], params["be2"],
               params["wd1z"], params["bd1"], params["wd2"], params["bd2"])

    in_specs = [
        pl.BlockSpec((bb, X_DIM), lambda i: (i, 0)),
        pl.BlockSpec((bb, Y_DIM), lambda i: (i, 0)),
        pl.BlockSpec((Y_DIM + 1, bb, Z_DIM), lambda i: (0, i, 0)),
    ] + [_const_spec(w.shape) for w in weights]

    out_shapes = (
        jax.ShapeDtypeStruct((bp, 2 * ZS), jnp.float32),           # [mu|logvar|logits|pad]
        jax.ShapeDtypeStruct((bp, X_DIM), jnp.bfloat16),           # labelled reconstruction
        jax.ShapeDtypeStruct((bp, Y_DIM * ZS), jnp.float32),       # per-class [mu|logvar]
        jax.ShapeDtypeStruct((bp, Y_DIM * X_DIM), jnp.bfloat16),   # per-class reconstruction
    )
    out_specs = [
        pl.BlockSpec((bb, 2 * ZS), lambda i: (i, 0)),
        pl.BlockSpec((bb, X_DIM), lambda i: (i, 0)),
        pl.BlockSpec((bb, Y_DIM * ZS), lambda i: (i, 0)),
        pl.BlockSpec((bb, Y_DIM * X_DIM), lambda i: (i, 0)),
    ]

    return pl.pallas_call(
        _sslvae_kernel,
        out_shape=out_shapes,
        grid=(bp // bb,),
        in_specs=in_specs,
        out_specs=out_specs,
        compiler_params=pltpu.CompilerParams(dimension_semantics=("parallel",)),
    )(x_pad, yoh_pad, eps, *weights)


def init_params(key):
    ks = jax.random.split(key, 9)
    scale = 0.05
    f32, bf16 = jnp.float32, jnp.bfloat16

    def w(k, shape):
        return jax.random.normal(k, shape, f32) * scale

    # fused first layer weight: x @ [wc1 | we1x]
    w_x1 = jnp.concatenate([w(ks[0], (X_DIM, HIDDEN)),
                            w(ks[1], (X_DIM, HIDDEN))], axis=1).astype(bf16)   # (256,128)
    b_x1 = jnp.zeros((1, 2 * HIDDEN), f32)

    # classifier head zero-padded to 128 lanes -> lane-dense logits
    wc2 = w(ks[2], (HIDDEN, Y_DIM))
    wc2_pad = jnp.zeros((HIDDEN, LOGIT_PAD), f32).at[:, :Y_DIM].set(wc2).astype(bf16)
    bc2 = jnp.zeros((1, LOGIT_PAD), f32)

    # fused label embedding: yoh @ [we1y | wd1y]
    w_y1 = jnp.concatenate([w(ks[3], (Y_DIM, HIDDEN)),
                            w(ks[4], (Y_DIM, HIDDEN))], axis=1)                # (4,128) f32

    # fused encoder second layer: [mu | logvar]
    we2 = jnp.concatenate([w(ks[5], (HIDDEN, Z_DIM)),
                           w(ks[6], (HIDDEN, Z_DIM))], axis=1).astype(bf16)    # (64,128)
    be2 = jnp.zeros((1, 2 * Z_DIM), f32)

    return dict(
        w_x1=w_x1, b_x1=b_x1, wc2=wc2_pad, bc2=bc2, w_y1=w_y1,
        we2=we2, be2=be2,
        wd1z=w(ks[7], (Z_DIM, HIDDEN)).astype(bf16), bd1=jnp.zeros((1, HIDDEN), f32),
        wd2=w(ks[8], (HIDDEN, X_DIM)).astype(bf16), bd2=jnp.zeros((1, X_DIM), f32),
    )


def sslvae_forward(params, X, y_np, rng):
    """Returns (pred_logits, z_sample_lab, z_suff_stat_lab, reconstruct_lab,
                z_sample_unlab, z_suff_stat_unlab, reconstruct_unlab)."""
    B = X.shape[0]
    x_flat = X.reshape(B, -1)
    if y_np is None:
        y_np = -np.ones((B,), np.int32)
    y_np = np.asarray(y_np)

    bp, bb = _pad_batch(B)
    pad = bp - B
    x_pad = jnp.pad(x_flat.astype(jnp.bfloat16), ((0, pad), (0, 0)))   # bf16 input DMA
    # dummy class-0 one-hot for unlabelled / pad rows; their labelled outputs are discarded
    yoh = jax.nn.one_hot(jnp.asarray(np.clip(y_np, 0, Y_DIM - 1)), Y_DIM, dtype=jnp.float32)
    yoh_pad = jnp.pad(yoh, ((0, pad), (0, 0)))

    # eps[0] -> labelled branch, eps[1+c] -> class c of the unlabelled marginalization
    eps = jax.random.normal(rng, (Y_DIM + 1, bp, Z_DIM), jnp.float32)

    lab_out, rec_lab_flat, un_pack, rec_un_flat = _sslvae_core(
        params, x_pad, yoh_pad, eps, bb=bb)

    pred_logits = lab_out[:B, ZS:ZS + Y_DIM]

    # data-dependent output selection (glue only; kernel shapes stay static)
    lab_idx = np.nonzero(y_np >= 0)[0]
    unlab_idx = np.nonzero(y_np < 0)[0]
    n_lab, n_unlab = len(lab_idx), len(unlab_idx)
    assert n_lab != 0 or n_unlab != 0

    if n_lab > 0:
        li = jnp.asarray(lab_idx)
        zs_lab = jnp.take(lab_out[:, :ZS], li, axis=0)
        eps_l = jnp.take(eps[0], li, axis=0)
        # z recomputed from the SAME eps used in-kernel (decoder used in-kernel f32 z)
        z_lab = zs_lab[:, :Z_DIM] + jnp.exp(0.5 * zs_lab[:, Z_DIM:]) * eps_l
        rec_lab = jnp.take(rec_lab_flat, li, axis=0).astype(jnp.float32).reshape(
            (n_lab,) + X_SHAPE)
    else:
        z_lab = jnp.zeros((0, Z_DIM), jnp.float32)
        zs_lab = jnp.zeros((0, ZS), jnp.float32)
        rec_lab = jnp.zeros((0,) + X_SHAPE, jnp.float32)

    if n_unlab > 0:
        ui = jnp.asarray(unlab_idx)
        zs_un = jnp.take(un_pack, ui, axis=0).reshape(n_unlab, Y_DIM, ZS)
        eps_u = jnp.take(jnp.swapaxes(eps[1:], 0, 1), ui, axis=0)      # (n_unlab, Y_DIM, Z)
        z_un = zs_un[..., :Z_DIM] + jnp.exp(0.5 * zs_un[..., Z_DIM:]) * eps_u
        rec_un = jnp.take(rec_un_flat, ui, axis=0).astype(jnp.float32).reshape(
            (n_unlab, Y_DIM) + X_SHAPE)
    else:
        z_un = jnp.zeros((0, Y_DIM, Z_DIM), jnp.float32)
        zs_un = jnp.zeros((0, Y_DIM, ZS), jnp.float32)
        rec_un = jnp.zeros((0, Y_DIM) + X_SHAPE, jnp.float32)

    return (pred_logits, z_lab, zs_lab, rec_lab, z_un, zs_un, rec_un)


# ----------------------------- demo / smoke test ----------------------------
if __name__ == "__main__":
    key = jax.random.PRNGKey(0)
    k_param, k_x, k_rep = jax.random.split(key, 3)

    params = init_params(k_param)

    B = 4
    X = jax.random.uniform(k_x, (B,) + X_SHAPE, jnp.float32)      # NCHW, values in [0,1)
    y = np.array([1, 3, -1, -1], dtype=np.int32)                  # 2 labelled, 2 unlabelled

    out = sslvae_forward(params, X, y, k_rep)
    out = jax.block_until_ready(out)

    (pred_logits, z_lab, zs_lab, rec_lab, z_un, zs_un, rec_un) = out
    assert pred_logits.shape == (B, Y_DIM)
    assert z_lab.shape == (2, Z_DIM)
    assert zs_lab.shape == (2, 2 * Z_DIM)
    assert rec_lab.shape == (2,) + X_SHAPE
    assert z_un.shape == (2, Y_DIM, Z_DIM)
    assert zs_un.shape == (2, Y_DIM, 2 * Z_DIM)
    assert rec_un.shape == (2, Y_DIM) + X_SHAPE
    assert bool(jnp.all((rec_lab >= 0) & (rec_lab <= 1)))
    assert bool(jnp.all((rec_un >= 0) & (rec_un <= 1)))
    assert bool(jnp.all(jnp.isfinite(pred_logits)))
    assert bool(jnp.all(jnp.isfinite(z_lab))) and bool(jnp.all(jnp.isfinite(z_un)))

    print("KERNEL_OK")
</pallas_src>

<mosaic_0001>
module attributes {stable_mosaic.version = 11 : i64} {
  func.func @_sslvae_kernel(%arg0: i32, %arg1: memref<8x256xbf16, #tpu.memory_space<vmem>>, %arg2: memref<8x4xf32, #tpu.memory_space<vmem>>, %arg3: memref<5x8x64xf32, #tpu.memory_space<vmem>>, %arg4: memref<256x128xbf16, #tpu.memory_space<vmem>>, %arg5: memref<1x128xf32, #tpu.memory_space<vmem>>, %arg6: memref<64x128xbf16, #tpu.memory_space<vmem>>, %arg7: memref<1x128xf32, #tpu.memory_space<vmem>>, %arg8: memref<4x128xf32, #tpu.memory_space<vmem>>, %arg9: memref<64x128xbf16, #tpu.memory_space<vmem>>, %arg10: memref<1x128xf32, #tpu.memory_space<vmem>>, %arg11: memref<64x64xbf16, #tpu.memory_space<vmem>>, %arg12: memref<1x64xf32, #tpu.memory_space<vmem>>, %arg13: memref<64x256xbf16, #tpu.memory_space<vmem>>, %arg14: memref<1x256xf32, #tpu.memory_space<vmem>>, %arg15: memref<8x256xf32, #tpu.memory_space<vmem>>, %arg16: memref<8x256xbf16, #tpu.memory_space<vmem>>, %arg17: memref<8x512xf32, #tpu.memory_space<vmem>>, %arg18: memref<8x1024xbf16, #tpu.memory_space<vmem>>) attributes {dimension_semantics = [#tpu.dimension_semantics<parallel>], iteration_bounds = array<i64: 1>, scalar_prefetch = 0 : i64, scratch_operands = 0 : i64, tpu.core_type = #tpu.core_type<tc>, window_params = [{transform_indices = @transform_0, window_bounds = array<i64: 8, 256>}, {transform_indices = @transform_1, window_bounds = array<i64: 8, 4>}, {transform_indices = @transform_2, window_bounds = array<i64: 5, 8, 64>}, {pipeline_mode = #tpu.pipeline_mode<synchronous>, transform_indices = @transform_3, window_bounds = array<i64: 256, 128>}, {pipeline_mode = #tpu.pipeline_mode<synchronous>, transform_indices = @transform_4, window_bounds = array<i64: 1, 128>}, {pipeline_mode = #tpu.pipeline_mode<synchronous>, transform_indices = @transform_5, window_bounds = array<i64: 64, 128>}, {pipeline_mode = #tpu.pipeline_mode<synchronous>, transform_indices = @transform_6, window_bounds = array<i64: 1, 128>}, {pipeline_mode = #tpu.pipeline_mode<synchronous>, transform_indices = @transform_7, window_bounds = array<i64: 4, 128>}, {pipeline_mode = #tpu.pipeline_mode<synchronous>, transform_indices = @transform_8, window_bounds = array<i64: 64, 128>}, {pipeline_mode = #tpu.pipeline_mode<synchronous>, transform_indices = @transform_9, window_bounds = array<i64: 1, 128>}, {pipeline_mode = #tpu.pipeline_mode<synchronous>, transform_indices = @transform_10, window_bounds = array<i64: 64, 64>}, {pipeline_mode = #tpu.pipeline_mode<synchronous>, transform_indices = @transform_11, window_bounds = array<i64: 1, 64>}, {pipeline_mode = #tpu.pipeline_mode<synchronous>, transform_indices = @transform_12, window_bounds = array<i64: 64, 256>}, {pipeline_mode = #tpu.pipeline_mode<synchronous>, transform_indices = @transform_13, window_bounds = array<i64: 1, 256>}, {transform_indices = @transform_14, window_bounds = array<i64: 8, 256>}, {transform_indices = @transform_15, window_bounds = array<i64: 8, 256>}, {transform_indices = @transform_16, window_bounds = array<i64: 8, 512>}, {transform_indices = @transform_17, window_bounds = array<i64: 8, 1024>}]} {
    %c0 = arith.constant 0 : index
    %c0_0 = arith.constant 0 : index
    %0 = vector.load %arg1[%c0, %c0_0] : memref<8x256xbf16, #tpu.memory_space<vmem>>, vector<8x256xbf16>
    %c0_1 = arith.constant 0 : index
    %c0_2 = arith.constant 0 : index
    %1 = vector.load %arg2[%c0_1, %c0_2] : memref<8x4xf32, #tpu.memory_space<vmem>>, vector<8x4xf32>
    %c0_3 = arith.constant 0 : index
    %c0_4 = arith.constant 0 : index
    %2 = vector.load %arg4[%c0_3, %c0_4] : memref<256x128xbf16, #tpu.memory_space<vmem>>, vector<256x128xbf16>
    %cst = arith.constant dense<0.000000e+00> : vector<8x128xf32>
    %3 = tpu.matmul %0, %2, %cst {dimension_numbers = #tpu.dot_dimension_numbers<[1], [0], [0], [1], [0, 0, 1, 1], [], []>} : vector<8x256xbf16>, vector<256x128xbf16>, vector<8x128xf32> -> vector<8x128xf32>
    %c0_5 = arith.constant 0 : index
    %c0_6 = arith.constant 0 : index
    %4 = vector.load %arg5[%c0_5, %c0_6] : memref<1x128xf32, #tpu.memory_space<vmem>>, vector<1x128xf32>
    %5 = vector.broadcast %4 : vector<1x128xf32> to vector<8x128xf32>
    %6 = arith.addf %3, %5 : vector<8x128xf32>
    %7 = vector.extract_strided_slice %6 {offsets = [0, 0], sizes = [8, 64], strides = [1, 1]} : vector<8x128xf32> to vector<8x64xf32>
    %cst_7 = arith.constant 0.000000e+00 : f32
    %8 = vector.broadcast %cst_7 : f32 to vector<8x64xf32>
    %9 = arith.maximumf %7, %8 : vector<8x64xf32>
    %10 = vector.extract_strided_slice %6 {offsets = [0, 64], sizes = [8, 64], strides = [1, 1]} : vector<8x128xf32> to vector<8x64xf32>
    %11 = arith.truncf %9 : vector<8x64xf32> to vector<8x64xbf16>
    %c0_8 = arith.constant 0 : index
    %c0_9 = arith.constant 0 : index
    %12 = vector.load %arg6[%c0_8, %c0_9] : memref<64x128xbf16, #tpu.memory_space<vmem>>, vector<64x128xbf16>
    %cst_10 = arith.constant dense<0.000000e+00> : vector<8x128xf32>
    %13 = tpu.matmul %11, %12, %cst_10 {dimension_numbers = #tpu.dot_dimension_numbers<[1], [0], [0], [1], [0, 0, 1, 1], [], []>} : vector<8x64xbf16>, vector<64x128xbf16>, vector<8x128xf32> -> vector<8x128xf32>
    %c0_11 = arith.constant 0 : index
    %c0_12 = arith.constant 0 : index
    %14 = vector.load %arg7[%c0_11, %c0_12] : memref<1x128xf32, #tpu.memory_space<vmem>>, vector<1x128xf32>
    %15 = vector.broadcast %14 : vector<1x128xf32> to vector<8x128xf32>
    %16 = arith.addf %13, %15 : vector<8x128xf32>
    %c0_13 = arith.constant 0 : index
    %c0_14 = arith.constant 0 : index
    %17 = vector.load %arg8[%c0_13, %c0_14] : memref<4x128xf32, #tpu.memory_space<vmem>>, vector<4x128xf32>
    %18 = vector.extract_strided_slice %17 {offsets = [0, 0], sizes = [4, 64], strides = [1, 1]} : vector<4x128xf32> to vector<4x64xf32>
    %19 = vector.extract_strided_slice %17 {offsets = [0, 64], sizes = [4, 64], strides = [1, 1]} : vector<4x128xf32> to vector<4x64xf32>
    %cst_15 = arith.constant dense<0.000000e+00> : vector<8x128xf32>
    %20 = tpu.matmul %1, %17, %cst_15 {dimension_numbers = #tpu.dot_dimension_numbers<[1], [0], [0], [1], [0, 0, 1, 1], [], []>} : vector<8x4xf32>, vector<4x128xf32>, vector<8x128xf32> -> vector<8x128xf32>
    %21 = vector.extract_strided_slice %20 {offsets = [0, 0], sizes = [8, 64], strides = [1, 1]} : vector<8x128xf32> to vector<8x64xf32>
    %22 = vector.extract_strided_slice %20 {offsets = [0, 64], sizes = [8, 64], strides = [1, 1]} : vector<8x128xf32> to vector<8x64xf32>
    %23 = arith.addf %10, %21 : vector<8x64xf32>
    %cst_16 = arith.constant 0.000000e+00 : f32
    %24 = vector.broadcast %cst_16 : f32 to vector<8x64xf32>
    %25 = arith.maximumf %23, %24 : vector<8x64xf32>
    %26 = vector.extract_strided_slice %18 {offsets = [0, 0], sizes = [1, 64], strides = [1, 1]} : vector<4x64xf32> to vector<1x64xf32>
    %27 = vector.broadcast %26 : vector<1x64xf32> to vector<8x64xf32>
    %28 = arith.addf %10, %27 : vector<8x64xf32>
    %cst_17 = arith.constant 0.000000e+00 : f32
    %29 = vector.broadcast %cst_17 : f32 to vector<8x64xf32>
    %30 = arith.maximumf %28, %29 : vector<8x64xf32>
    %31 = vector.extract_strided_slice %18 {offsets = [1, 0], sizes = [1, 64], strides = [1, 1]} : vector<4x64xf32> to vector<1x64xf32>
    %32 = vector.broadcast %31 : vector<1x64xf32> to vector<8x64xf32>
    %33 = arith.addf %10, %32 : vector<8x64xf32>
    %cst_18 = arith.constant 0.000000e+00 : f32
    %34 = vector.broadcast %cst_18 : f32 to vector<8x64xf32>
    %35 = arith.maximumf %33, %34 : vector<8x64xf32>
    %36 = vector.extract_strided_slice %18 {offsets = [2, 0], sizes = [1, 64], strides = [1, 1]} : vector<4x64xf32> to vector<1x64xf32>
    %37 = vector.broadcast %36 : vector<1x64xf32> to vector<8x64xf32>
    %38 = arith.addf %10, %37 : vector<8x64xf32>
    %cst_19 = arith.constant 0.000000e+00 : f32
    %39 = vector.broadcast %cst_19 : f32 to vector<8x64xf32>
    %40 = arith.maximumf %38, %39 : vector<8x64xf32>
    %41 = vector.extract_strided_slice %18 {offsets = [3, 0], sizes = [1, 64], strides = [1, 1]} : vector<4x64xf32> to vector<1x64xf32>
    %42 = vector.broadcast %41 : vector<1x64xf32> to vector<8x64xf32>
    %43 = arith.addf %10, %42 : vector<8x64xf32>
    %cst_20 = arith.constant 0.000000e+00 : f32
    %44 = vector.broadcast %cst_20 : f32 to vector<8x64xf32>
    %45 = arith.maximumf %43, %44 : vector<8x64xf32>
    %46 = tpu.concatenate %25, %30, %35, %40, %45 in 0 : vector<8x64xf32>, vector<8x64xf32>, vector<8x64xf32>, vector<8x64xf32>, vector<8x64xf32> -> vector<40x64xf32>
    %47 = vector.extract_strided_slice %19 {offsets = [0, 0], sizes = [1, 64], strides = [1, 1]} : vector<4x64xf32> to vector<1x64xf32>
    %48 = vector.shape_cast %47 : vector<1x64xf32> to vector<1x64xf32>
    %49 = vector.broadcast %48 : vector<1x64xf32> to vector<8x64xf32>
    %50 = vector.extract_strided_slice %19 {offsets = [1, 0], sizes = [1, 64], strides = [1, 1]} : vector<4x64xf32> to vector<1x64xf32>
    %51 = vector.shape_cast %50 : vector<1x64xf32> to vector<1x64xf32>
    %52 = vector.broadcast %51 : vector<1x64xf32> to vector<8x64xf32>
    %53 = vector.extract_strided_slice %19 {offsets = [2, 0], sizes = [1, 64], strides = [1, 1]} : vector<4x64xf32> to vector<1x64xf32>
    %54 = vector.shape_cast %53 : vector<1x64xf32> to vector<1x64xf32>
    %55 = vector.broadcast %54 : vector<1x64xf32> to vector<8x64xf32>
    %56 = vector.extract_strided_slice %19 {offsets = [3, 0], sizes = [1, 64], strides = [1, 1]} : vector<4x64xf32> to vector<1x64xf32>
    %57 = vector.shape_cast %56 : vector<1x64xf32> to vector<1x64xf32>
    %58 = vector.broadcast %57 : vector<1x64xf32> to vector<8x64xf32>
    %59 = tpu.concatenate %22, %49, %52, %55, %58 in 0 : vector<8x64xf32>, vector<8x64xf32>, vector<8x64xf32>, vector<8x64xf32>, vector<8x64xf32> -> vector<40x64xf32>
    %c0_21 = arith.constant 0 : index
    %c0_22 = arith.constant 0 : index
    %c0_23 = arith.constant 0 : index
    %60 = vector.load %arg3[%c0_21, %c0_22, %c0_23] : memref<5x8x64xf32, #tpu.memory_space<vmem>>, vector<5x8x64xf32>
    %61 = vector.shape_cast %60 : vector<5x8x64xf32> to vector<40x64xf32>
    %62 = arith.truncf %46 : vector<40x64xf32> to vector<40x64xbf16>
    %c0_24 = arith.constant 0 : index
    %c0_25 = arith.constant 0 : index
    %63 = vector.load %arg9[%c0_24, %c0_25] : memref<64x128xbf16, #tpu.memory_space<vmem>>, vector<64x128xbf16>
    %cst_26 = arith.constant dense<0.000000e+00> : vector<40x128xf32>
    %64 = tpu.matmul %62, %63, %cst_26 {dimension_numbers = #tpu.dot_dimension_numbers<[1], [0], [0], [1], [0, 0, 1, 1], [], []>} : vector<40x64xbf16>, vector<64x128xbf16>, vector<40x128xf32> -> vector<40x128xf32>
    %c0_27 = arith.constant 0 : index
    %c0_28 = arith.constant 0 : index
    %65 = vector.load %arg10[%c0_27, %c0_28] : memref<1x128xf32, #tpu.memory_space<vmem>>, vector<1x128xf32>
    %66 = vector.broadcast %65 : vector<1x128xf32> to vector<40x128xf32>
    %67 = arith.addf %64, %66 : vector<40x128xf32>
    %68 = vector.extract_strided_slice %67 {offsets = [0, 0], sizes = [40, 64], strides = [1, 1]} : vector<40x128xf32> to vector<40x64xf32>
    %69 = vector.extract_strided_slice %67 {offsets = [0, 64], sizes = [40, 64], strides = [1, 1]} : vector<40x128xf32> to vector<40x64xf32>
    %cst_29 = arith.constant 5.000000e-01 : f32
    %70 = vector.broadcast %cst_29 : f32 to vector<40x64xf32>
    %71 = arith.mulf %70, %69 : vector<40x64xf32>
    %72 = math.exp %71 : vector<40x64xf32>
    %73 = arith.mulf %72, %61 : vector<40x64xf32>
    %74 = arith.addf %68, %73 : vector<40x64xf32>
    %75 = arith.truncf %74 : vector<40x64xf32> to vector<40x64xbf16>
    %c0_30 = arith.constant 0 : index
    %c0_31 = arith.constant 0 : index
    %76 = vector.load %arg11[%c0_30, %c0_31] : memref<64x64xbf16, #tpu.memory_space<vmem>>, vector<64x64xbf16>
    %cst_32 = arith.constant dense<0.000000e+00> : vector<40x64xf32>
    %77 = tpu.matmul %75, %76, %cst_32 {dimension_numbers = #tpu.dot_dimension_numbers<[1], [0], [0], [1], [0, 0, 1, 1], [], []>} : vector<40x64xbf16>, vector<64x64xbf16>, vector<40x64xf32> -> vector<40x64xf32>
    %78 = arith.addf %77, %59 : vector<40x64xf32>
    %c0_33 = arith.constant 0 : index
    %c0_34 = arith.constant 0 : index
    %79 = vector.load %arg12[%c0_33, %c0_34] : memref<1x64xf32, #tpu.memory_space<vmem>>, vector<1x64xf32>
    %80 = vector.broadcast %79 : vector<1x64xf32> to vector<40x64xf32>
    %81 = arith.addf %78, %80 : vector<40x64xf32>
    %cst_35 = arith.constant 0.000000e+00 : f32
    %82 = vector.broadcast %cst_35 : f32 to vector<40x64xf32>
    %83 = arith.maximumf %81, %82 : vector<40x64xf32>
    %84 = arith.truncf %83 : vector<40x64xf32> to vector<40x64xbf16>
    %c0_36 = arith.constant 0 : index
    %c0_37 = arith.constant 0 : index
    %85 = vector.load %arg13[%c0_36, %c0_37] : memref<64x256xbf16, #tpu.memory_space<vmem>>, vector<64x256xbf16>
    %cst_38 = arith.constant dense<0.000000e+00> : vector<40x256xf32>
    %86 = tpu.matmul %84, %85, %cst_38 {dimension_numbers = #tpu.dot_dimension_numbers<[1], [0], [0], [1], [0, 0, 1, 1], [], []>} : vector<40x64xbf16>, vector<64x256xbf16>, vector<40x256xf32> -> vector<40x256xf32>
    %c0_39 = arith.constant 0 : index
    %c0_40 = arith.constant 0 : index
    %87 = vector.load %arg14[%c0_39, %c0_40] : memref<1x256xf32, #tpu.memory_space<vmem>>, vector<1x256xf32>
    %88 = vector.broadcast %87 : vector<1x256xf32> to vector<40x256xf32>
    %89 = arith.addf %86, %88 : vector<40x256xf32>
    %90 = arith.negf %89 : vector<40x256xf32>
    %91 = math.exp %90 : vector<40x256xf32>
    %cst_41 = arith.constant 1.000000e+00 : f32
    %92 = vector.broadcast %cst_41 : f32 to vector<40x256xf32>
    %93 = arith.addf %92, %91 : vector<40x256xf32>
    %94 = arith.divf %92, %93 : vector<40x256xf32>
    %95 = vector.extract_strided_slice %67 {offsets = [0, 0], sizes = [8, 128], strides = [1, 1]} : vector<40x128xf32> to vector<8x128xf32>
    %96 = tpu.concatenate %95, %16 in 1 : vector<8x128xf32>, vector<8x128xf32> -> vector<8x256xf32>
    %c0_42 = arith.constant 0 : index
    %c0_43 = arith.constant 0 : index
    %97 = vector.load %arg15[%c0_42, %c0_43] : memref<8x256xf32, #tpu.memory_space<vmem>>, vector<8x256xf32>
    tpu.vector_store %arg15[%c0_42, %c0_43], %96 {strides = array<i32>} : memref<8x256xf32, #tpu.memory_space<vmem>>, vector<8x256xf32>,
    %98 = vector.extract_strided_slice %94 {offsets = [0, 0], sizes = [8, 256], strides = [1, 1]} : vector<40x256xf32> to vector<8x256xf32>
    %99 = arith.truncf %98 : vector<8x256xf32> to vector<8x256xbf16>
    %c0_44 = arith.constant 0 : index
    %c0_45 = arith.constant 0 : index
    %100 = vector.load %arg16[%c0_44, %c0_45] : memref<8x256xbf16, #tpu.memory_space<vmem>>, vector<8x256xbf16>
    tpu.vector_store %arg16[%c0_44, %c0_45], %99 {strides = array<i32>} : memref<8x256xbf16, #tpu.memory_space<vmem>>, vector<8x256xbf16>,
    %101 = vector.extract_strided_slice %67 {offsets = [8, 0], sizes = [8, 128], strides = [1, 1]} : vector<40x128xf32> to vector<8x128xf32>
    %c0_46 = arith.constant 0 : index
    %c0_47 = arith.constant 0 : index
    %102 = vector.load %arg17[%c0_46, %c0_47] : memref<8x512xf32, #tpu.memory_space<vmem>>, vector<8x128xf32>
    tpu.vector_store %arg17[%c0_46, %c0_47], %101 {strides = array<i32>} : memref<8x512xf32, #tpu.memory_space<vmem>>, vector<8x128xf32>,
    %103 = vector.extract_strided_slice %94 {offsets = [8, 0], sizes = [8, 256], strides = [1, 1]} : vector<40x256xf32> to vector<8x256xf32>
    %104 = arith.truncf %103 : vector<8x256xf32> to vector<8x256xbf16>
    %c0_48 = arith.constant 0 : index
    %c0_49 = arith.constant 0 : index
    %105 = vector.load %arg18[%c0_48, %c0_49] : memref<8x1024xbf16, #tpu.memory_space<vmem>>, vector<8x256xbf16>
    tpu.vector_store %arg18[%c0_48, %c0_49], %104 {strides = array<i32>} : memref<8x1024xbf16, #tpu.memory_space<vmem>>, vector<8x256xbf16>,
    %106 = vector.extract_strided_slice %67 {offsets = [16, 0], sizes = [8, 128], strides = [1, 1]} : vector<40x128xf32> to vector<8x128xf32>
    %c0_50 = arith.constant 0 : index
    %c128 = arith.constant 128 : index
    %107 = vector.load %arg17[%c0_50, %c128] : memref<8x512xf32, #tpu.memory_space<vmem>>, vector<8x128xf32>
    tpu.vector_store %arg17[%c0_50, %c128], %106 {strides = array<i32>} : memref<8x512xf32, #tpu.memory_space<vmem>>, vector<8x128xf32>,
    %108 = vector.extract_strided_slice %94 {offsets = [16, 0], sizes = [8, 256], strides = [1, 1]} : vector<40x256xf32> to vector<8x256xf32>
    %109 = arith.truncf %108 : vector<8x256xf32> to vector<8x256xbf16>
    %c0_51 = arith.constant 0 : index
    %c256 = arith.constant 256 : index
    %110 = vector.load %arg18[%c0_51, %c256] : memref<8x1024xbf16, #tpu.memory_space<vmem>>, vector<8x256xbf16>
    tpu.vector_store %arg18[%c0_51, %c256], %109 {strides = array<i32>} : memref<8x1024xbf16, #tpu.memory_space<vmem>>, vector<8x256xbf16>,
    %111 = vector.extract_strided_slice %67 {offsets = [24, 0], sizes = [8, 128], strides = [1, 1]} : vector<40x128xf32> to vector<8x128xf32>
    %c0_52 = arith.constant 0 : index
    %c256_53 = arith.constant 256 : index
    %112 = vector.load %arg17[%c0_52, %c256_53] : memref<8x512xf32, #tpu.memory_space<vmem>>, vector<8x128xf32>
    tpu.vector_store %arg17[%c0_52, %c256_53], %111 {strides = array<i32>} : memref<8x512xf32, #tpu.memory_space<vmem>>, vector<8x128xf32>,
    %113 = vector.extract_strided_slice %94 {offsets = [24, 0], sizes = [8, 256], strides = [1, 1]} : vector<40x256xf32> to vector<8x256xf32>
    %114 = arith.truncf %113 : vector<8x256xf32> to vector<8x256xbf16>
    %c0_54 = arith.constant 0 : index
    %c512 = arith.constant 512 : index
    %115 = vector.load %arg18[%c0_54, %c512] : memref<8x1024xbf16, #tpu.memory_space<vmem>>, vector<8x256xbf16>
    tpu.vector_store %arg18[%c0_54, %c512], %114 {strides = array<i32>} : memref<8x1024xbf16, #tpu.memory_space<vmem>>, vector<8x256xbf16>,
    %116 = vector.extract_strided_slice %67 {offsets = [32, 0], sizes = [8, 128], strides = [1, 1]} : vector<40x128xf32> to vector<8x128xf32>
    %c0_55 = arith.constant 0 : index
    %c384 = arith.constant 384 : index
    %117 = vector.load %arg17[%c0_55, %c384] : memref<8x512xf32, #tpu.memory_space<vmem>>, vector<8x128xf32>
    tpu.vector_store %arg17[%c0_55, %c384], %116 {strides = array<i32>} : memref<8x512xf32, #tpu.memory_space<vmem>>, vector<8x128xf32>,
    %118 = vector.extract_strided_slice %94 {offsets = [32, 0], sizes = [8, 256], strides = [1, 1]} : vector<40x256xf32> to vector<8x256xf32>
    %119 = arith.truncf %118 : vector<8x256xf32> to vector<8x256xbf16>
    %c0_56 = arith.constant 0 : index
    %c768 = arith.constant 768 : index
    %120 = vector.load %arg18[%c0_56, %c768] : memref<8x1024xbf16, #tpu.memory_space<vmem>>, vector<8x256xbf16>
    tpu.vector_store %arg18[%c0_56, %c768], %119 {strides = array<i32>} : memref<8x1024xbf16, #tpu.memory_space<vmem>>, vector<8x256xbf16>,
    return
  }
  func.func @transform_0(%arg0: i32) -> (i32, i32) {
    %c0_i32 = arith.constant 0 : i32
    %c0_i32_0 = arith.constant 0 : i32
    return %arg0, %c0_i32 : i32, i32
  }
  func.func @transform_1(%arg0: i32) -> (i32, i32) {
    %c0_i32 = arith.constant 0 : i32
    %c0_i32_0 = arith.constant 0 : i32
    return %arg0, %c0_i32 : i32, i32
  }
  func.func @transform_2(%arg0: i32) -> (i32, i32, i32) {
    %c0_i32 = arith.constant 0 : i32
    %c0_i32_0 = arith.constant 0 : i32
    %c0_i32_1 = arith.constant 0 : i32
    return %c0_i32, %arg0, %c0_i32_0 : i32, i32, i32
  }
  func.func @transform_3(%arg0: i32) -> (i32, i32) {
    %c0_i32 = arith.constant 0 : i32
    %c0_i32_0 = arith.constant 0 : i32
    %c0_i32_1 = arith.constant 0 : i32
    return %c0_i32, %c0_i32_0 : i32, i32
  }
  func.func @transform_4(%arg0: i32) -> (i32, i32) {
    %c0_i32 = arith.constant 0 : i32
    %c0_i32_0 = arith.constant 0 : i32
    %c0_i32_1 = arith.constant 0 : i32
    return %c0_i32, %c0_i32_0 : i32, i32
  }
  func.func @transform_5(%arg0: i32) -> (i32, i32) {
    %c0_i32 = arith.constant 0 : i32
    %c0_i32_0 = arith.constant 0 : i32
    %c0_i32_1 = arith.constant 0 : i32
    return %c0_i32, %c0_i32_0 : i32, i32
  }
  func.func @transform_6(%arg0: i32) -> (i32, i32) {
    %c0_i32 = arith.constant 0 : i32
    %c0_i32_0 = arith.constant 0 : i32
    %c0_i32_1 = arith.constant 0 : i32
    return %c0_i32, %c0_i32_0 : i32, i32
  }
  func.func @transform_7(%arg0: i32) -> (i32, i32) {
    %c0_i32 = arith.constant 0 : i32
    %c0_i32_0 = arith.constant 0 : i32
    %c0_i32_1 = arith.constant 0 : i32
    return %c0_i32, %c0_i32_0 : i32, i32
  }
  func.func @transform_8(%arg0: i32) -> (i32, i32) {
    %c0_i32 = arith.constant 0 : i32
    %c0_i32_0 = arith.constant 0 : i32
    %c0_i32_1 = arith.constant 0 : i32
    return %c0_i32, %c0_i32_0 : i32, i32
  }
  func.func @transform_9(%arg0: i32) -> (i32, i32) {
    %c0_i32 = arith.constant 0 : i32
    %c0_i32_0 = arith.constant 0 : i32
    %c0_i32_1 = arith.constant 0 : i32
    return %c0_i32, %c0_i32_0 : i32, i32
  }
  func.func @transform_10(%arg0: i32) -> (i32, i32) {
    %c0_i32 = arith.constant 0 : i32
    %c0_i32_0 = arith.constant 0 : i32
    %c0_i32_1 = arith.constant 0 : i32
    return %c0_i32, %c0_i32_0 : i32, i32
  }
  func.func @transform_11(%arg0: i32) -> (i32, i32) {
    %c0_i32 = arith.constant 0 : i32
    %c0_i32_0 = arith.constant 0 : i32
    %c0_i32_1 = arith.constant 0 : i32
    return %c0_i32, %c0_i32_0 : i32, i32
  }
  func.func @transform_12(%arg0: i32) -> (i32, i32) {
    %c0_i32 = arith.constant 0 : i32
    %c0_i32_0 = arith.constant 0 : i32
    %c0_i32_1 = arith.constant 0 : i32
    return %c0_i32, %c0_i32_0 : i32, i32
  }
  func.func @transform_13(%arg0: i32) -> (i32, i32) {
    %c0_i32 = arith.constant 0 : i32
    %c0_i32_0 = arith.constant 0 : i32
    %c0_i32_1 = arith.constant 0 : i32
    return %c0_i32, %c0_i32_0 : i32, i32
  }
  func.func @transform_14(%arg0: i32) -> (i32, i32) {
    %c0_i32 = arith.constant 0 : i32
    %c0_i32_0 = arith.constant 0 : i32
    return %arg0, %c0_i32 : i32, i32
  }
  func.func @transform_15(%arg0: i32) -> (i32, i32) {
    %c0_i32 = arith.constant 0 : i32
    %c0_i32_0 = arith.constant 0 : i32
    return %arg0, %c0_i32 : i32, i32
  }
  func.func @transform_16(%arg0: i32) -> (i32, i32) {
    %c0_i32 = arith.constant 0 : i32
    %c0_i32_0 = arith.constant 0 : i32
    return %arg0, %c0_i32 : i32, i32
  }
  func.func @transform_17(%arg0: i32) -> (i32, i32) {
    %c0_i32 = arith.constant 0 : i32
    %c0_i32_0 = arith.constant 0 : i32
    return %arg0, %c0_i32 : i32, i32
  }
}

</mosaic_0001>

<llo_original>
// kernel: _sslvae_core.1
$region0: #{_sslvae_core.1}
  #allocation0 [shape = 'u32[]', space=smem, size = 0x4, offset = 0x4, fixed_abs, tag = 'smem constant byte address 0x4 - core index']
  #allocation1 [shape = 'u32[72,128]{1,0:T(1,128)}', space=vmem, size = 0x9000, scoped, tag = 'internal scratch']
  %s0 = inlined_call_operand.vmem [shape: bf16[8,256], index: 0, kind: input, shape index: {}]
  %s1 = inlined_call_operand.vmem [shape: f32[8,4], index: 1, kind: input, shape index: {}]
  %s2 = inlined_call_operand.hbm [shape: f32[5,8,64], index: 2, kind: input, shape index: {}]
  %s3 = inlined_call_operand.hbm [shape: bf16[256,128], index: 3, kind: input, shape index: {}]
  %s4 = inlined_call_operand.vmem [shape: f32[1,128], index: 4, kind: input, shape index: {}]
  %s5 = inlined_call_operand.hbm [shape: bf16[64,128], index: 5, kind: input, shape index: {}]
  %s6 = inlined_call_operand.hbm [shape: f32[1,128], index: 6, kind: input, shape index: {}]
  %s7 = inlined_call_operand.vmem [shape: f32[4,128], index: 7, kind: input, shape index: {}]
  %s8 = inlined_call_operand.hbm [shape: bf16[64,128], index: 8, kind: input, shape index: {}]
  %s9 = inlined_call_operand.hbm [shape: f32[1,128], index: 9, kind: input, shape index: {}]
  %s10 = inlined_call_operand.hbm [shape: bf16[64,64], index: 10, kind: input, shape index: {}]
  %s11 = inlined_call_operand.hbm [shape: f32[1,64], index: 11, kind: input, shape index: {}]
  %s12 = inlined_call_operand.hbm [shape: bf16[64,256], index: 12, kind: input, shape index: {}]
  %s13 = inlined_call_operand.vmem [shape: f32[1,256], index: 13, kind: input, shape index: {}]
  %s14 = inlined_call_operand.hbm [shape: f32[8,256], index: 14, kind: output, shape index: {0}]
  %s15 = inlined_call_operand.hbm [shape: bf16[8,256], index: 15, kind: output, shape index: {1}]
  %s16 = inlined_call_operand.hbm [shape: f32[8,512], index: 16, kind: output, shape index: {2}]
  %s17 = inlined_call_operand.hbm [shape: bf16[8,1024], index: 17, kind: output, shape index: {3}]
  %18 = xla_tuple %s14, %s15, %s16, %s17
  %s19 = sld [smem:[#allocation0]]
  $region126: #{_sslvae_core.1} parent=0
    _
  %s21 = ssub.s32 1, %s19
  %s22 = scalar_select 0, %s21, %s19
  $region1: #{_sslvae_core.1} parent=0
    #allocation2 [shape = 'u8[20480]{0}', space=vmem, size = 0x5000, scoped, tag = 'input window, operand 2, single buffered']
    #allocation3 [shape = 's32[1]{0}', space=sflag, size = 0x4, scoped, tag = 'scoped memory for _sslvae_core.1']
    #allocation4 [shape = 's32[1]{0}', space=sflag, size = 0x4, scoped, tag = 'scoped memory for _sslvae_core.1']
    #allocation5 [shape = 'u8[65536]{0}', space=vmem, size = 0x10000, scoped, tag = 'input window, operand 3, single buffered']
    #allocation6 [shape = 's32[1]{0}', space=sflag, size = 0x4, scoped, tag = 'scoped memory for _sslvae_core.1']
    #allocation7 [shape = 'u8[16384]{0}', space=vmem, size = 0x4000, scoped, tag = 'input window, operand 5, single buffered']
    #allocation8 [shape = 'u8[512]{0}', space=vmem, size = 0x400, scoped, tag = 'input window, operand 6, single buffered']
    #allocation9 [shape = 's32[1]{0}', space=sflag, size = 0x4, scoped, tag = 'scoped memory for _sslvae_core.1']
    #allocation10 [shape = 'u8[16384]{0}', space=vmem, size = 0x4000, scoped, tag = 'input window, operand 8, single buffered']
    #allocation11 [shape = 'u8[512]{0}', space=vmem, size = 0x400, scoped, tag = 'input window, operand 9, single buffered']
    #allocation12 [shape = 's32[1]{0}', space=sflag, size = 0x4, scoped, tag = 'scoped memory for _sslvae_core.1']
    #allocation13 [shape = 'u8[16384]{0}', space=vmem, size = 0x4000, scoped, tag = 'input window, operand 10, single buffered']
    #allocation14 [shape = 'u8[512]{0}', space=vmem, size = 0x400, scoped, tag = 'input window, operand 11, single buffered']
    #allocation15 [shape = 's32[1]{0}', space=sflag, size = 0x4, scoped, tag = 'scoped memory for _sslvae_core.1']
    #allocation16 [shape = 'u8[32768]{0}', space=vmem, size = 0x8000, scoped, tag = 'input window, operand 12, single buffered']
    #allocation17 [shape = 'u8[8192]{0}', space=vmem, size = 0x2000, scoped, tag = 'output window, operand 0, single buffered']
    #allocation18 [shape = 'u8[4096]{0}', space=vmem, size = 0x1000, scoped, tag = 'output window, operand 1, single buffered']
    #allocation19 [shape = 's32[1]{0}', space=sflag, size = 0x4, scoped, tag = 'scoped memory for _sslvae_core.1']
    #allocation20 [shape = 'u8[16384]{0}', space=vmem, size = 0x4000, scoped, tag = 'output window, operand 2, single buffered']
    #allocation21 [shape = 'u8[16384]{0}', space=vmem, size = 0x4000, scoped, tag = 'output window, operand 3, single buffered']
    #allocation22 [shape = 's32[1]{0}', space=sflag, size = 0x4, scoped, tag = 'scoped memory for _sslvae_core.1']
    %23 = vsyncpa [#allocation3], 0
    %24 = vsyncpa [#allocation6], 0
    %25 = vsyncpa [#allocation9], 0
    %26 = vsyncpa [#allocation12], 0
    %27 = vsyncpa [#allocation15], 0
    %28 = vsyncpa [#allocation4], 0
    %29 = vsyncpa [#allocation19], 0
    %30 = vsyncpa [#allocation22], 0
    // Predicated region
    $region2: #{_sslvae_core.1} parent=1 // pred_check
      _
    $region3: #{_sslvae_core.1} parent=1 // pred_check_branch
      %32 = sbr.rel (0) target = $region5
    $region4: #{_sslvae_core.1} parent=1 // pred_region
      _
    $region5: #{_sslvae_core.1} parent=1 // pred_fallthru
      _
    // Predicated region
    $region6: #{_sslvae_core.1} parent=1 // pred_check
      _
    $region7: #{_sslvae_core.1} parent=1 // pred_check_branch
      %34 = sbr.rel (0) target = $region9
    $region8: #{_sslvae_core.1} parent=1 // pred_region
      _
    $region9: #{_sslvae_core.1} parent=1 // pred_fallthru
      _
    // Predicated region
    $region10: #{_sslvae_core.1} parent=1 // pred_check
      _
    $region11: #{_sslvae_core.1} parent=1 // pred_check_branch
      %36 = sbr.rel (0) target = $region13
    $region12: #{_sslvae_core.1} parent=1 // pred_region
      %38 = vsyncadd [#allocation3], 0
      %s39 = sshll.u32 %s2, 4
      %s40 = int_to_ptr.hbm [resolvable:$true] %s39
      %s41 = sshll.u32 [#allocation2], 4
      %s42 = int_to_ptr.vmem [resolvable:$true] %s41
      %47 = dma.hbm_to_vmem [thread:$0]  %s40, 640, %s42, [#allocation3], 128, 128, 8
    $region13: #{_sslvae_core.1} parent=1 // pred_fallthru
      _
    // Predicated region
    $region14: #{_sslvae_core.1} parent=1 // pred_check
      _
    $region15: #{_sslvae_core.1} parent=1 // pred_check_branch
      %49 = sbr.rel (0) target = $region17
    $region16: #{_sslvae_core.1} parent=1 // pred_region
      %51 = vsyncadd [#allocation6], 0
      %s52 = sshll.u32 %s3, 4
      %s53 = int_to_ptr.hbm [resolvable:$true] %s52
      %s54 = sshll.u32 [#allocation5], 4
      %s55 = int_to_ptr.vmem [resolvable:$true] %s54
      %60 = dma.hbm_to_vmem [thread:$0]  %s53, 2048, %s55, [#allocation6], 64, 64, 4
    $region17: #{_sslvae_core.1} parent=1 // pred_fallthru
      _
    // Predicated region
    $region18: #{_sslvae_core.1} parent=1 // pred_check
      _
    $region19: #{_sslvae_core.1} parent=1 // pred_check_branch
      %62 = sbr.rel (0) target = $region21
    $region20: #{_sslvae_core.1} parent=1 // pred_region
      _
    $region21: #{_sslvae_core.1} parent=1 // pred_fallthru
      _
    // Predicated region
    $region22: #{_sslvae_core.1} parent=1 // pred_check
      _
    $region23: #{_sslvae_core.1} parent=1 // pred_check_branch
      %64 = sbr.rel (0) target = $region25
    $region24: #{_sslvae_core.1} parent=1 // pred_region
      %66 = vsyncadd [#allocation6], 0
      %s67 = sshll.u32 %s5, 4
      %s68 = int_to_ptr.hbm [resolvable:$true] %s67
      %s69 = sshll.u32 [#allocation7], 4
      %s70 = int_to_ptr.vmem [resolvable:$true] %s69
      %75 = dma.hbm_to_vmem [thread:$0]  %s68, 512, %s70, [#allocation6], 64, 64, 4
    $region25: #{_sslvae_core.1} parent=1 // pred_fallthru
      _
    // Predicated region
    $region26: #{_sslvae_core.1} parent=1 // pred_check
      _
    $region27: #{_sslvae_core.1} parent=1 // pred_check_branch
      %77 = sbr.rel (0) target = $region29
    $region28: #{_sslvae_core.1} parent=1 // pred_region
      %79 = vsyncadd [#allocation9], 0
      %s81 = sshll.u32 %s6, 4
      %s82 = int_to_ptr.hbm [resolvable:$true] %s81
      %s83 = sshll.u32 [#allocation8], 4
      %s84 = int_to_ptr.vmem [resolvable:$true] %s83
      %86 = dma.hbm_to_vmem [thread:$0]  %s82, 16, %s84, [#allocation9]
    $region29: #{_sslvae_core.1} parent=1 // pred_fallthru
      _
    // Predicated region
    $region30: #{_sslvae_core.1} parent=1 // pred_check
      _
    $region31: #{_sslvae_core.1} parent=1 // pred_check_branch
      %88 = sbr.rel (0) target = $region33
    $region32: #{_sslvae_core.1} parent=1 // pred_region
      _
    $region33: #{_sslvae_core.1} parent=1 // pred_fallthru
      _
    // Predicated region
    $region34: #{_sslvae_core.1} parent=1 // pred_check
      _
    $region35: #{_sslvae_core.1} parent=1 // pred_check_branch
      %90 = sbr.rel (0) target = $region37
    $region36: #{_sslvae_core.1} parent=1 // pred_region
      %92 = vsyncadd [#allocation9], 0
      %s93 = sshll.u32 %s8, 4
      %s94 = int_to_ptr.hbm [resolvable:$true] %s93
      %s95 = sshll.u32 [#allocation10], 4
      %s96 = int_to_ptr.vmem [resolvable:$true] %s95
      %101 = dma.hbm_to_vmem [thread:$0]  %s94, 512, %s96, [#allocation9], 64, 64, 4
    $region37: #{_sslvae_core.1} parent=1 // pred_fallthru
      _
    // Predicated region
    $region38: #{_sslvae_core.1} parent=1 // pred_check
      _
    $region39: #{_sslvae_core.1} parent=1 // pred_check_branch
      %103 = sbr.rel (0) target = $region41
    $region40: #{_sslvae_core.1} parent=1 // pred_region
      %105 = vsyncadd [#allocation12], 0
      %s107 = sshll.u32 %s9, 4
      %s108 = int_to_ptr.hbm [resolvable:$true] %s107
      %s109 = sshll.u32 [#allocation11], 4
      %s110 = int_to_ptr.vmem [resolvable:$true] %s109
      %112 = dma.hbm_to_vmem [thread:$0]  %s108, 16, %s110, [#allocation12]
    $region41: #{_sslvae_core.1} parent=1 // pred_fallthru
      _
    // Predicated region
    $region42: #{_sslvae_core.1} parent=1 // pred_check
      _
    $region43: #{_sslvae_core.1} parent=1 // pred_check_branch
      %114 = sbr.rel (0) target = $region45
    $region44: #{_sslvae_core.1} parent=1 // pred_region
      %116 = vsyncadd [#allocation12], 0
      %s117 = sshll.u32 %s10, 4
      %s118 = int_to_ptr.hbm [resolvable:$true] %s117
      %s119 = sshll.u32 [#allocation13], 4
      %s120 = int_to_ptr.vmem [resolvable:$true] %s119
      %125 = dma.hbm_to_vmem [thread:$0]  %s118, 512, %s120, [#allocation12], 64, 64, 4
    $region45: #{_sslvae_core.1} parent=1 // pred_fallthru
      _
    // Predicated region
    $region46: #{_sslvae_core.1} parent=1 // pred_check
      _
    $region47: #{_sslvae_core.1} parent=1 // pred_check_branch
      %127 = sbr.rel (0) target = $region49
    $region48: #{_sslvae_core.1} parent=1 // pred_region
      %129 = vsyncadd [#allocation15], 0
      %s131 = sshll.u32 %s11, 4
      %s132 = int_to_ptr.hbm [resolvable:$true] %s131
      %s133 = sshll.u32 [#allocation14], 4
      %s134 = int_to_ptr.vmem [resolvable:$true] %s133
      %136 = dma.hbm_to_vmem [thread:$0]  %s132, 16, %s134, [#allocation15]
    $region49: #{_sslvae_core.1} parent=1 // pred_fallthru
      _
    // Predicated region
    $region50: #{_sslvae_core.1} parent=1 // pred_check
      _
    $region51: #{_sslvae_core.1} parent=1 // pred_check_branch
      %138 = sbr.rel (0) target = $region53
    $region52: #{_sslvae_core.1} parent=1 // pred_region
      %140 = vsyncadd [#allocation15], 0
      %s141 = sshll.u32 %s12, 4
      %s142 = int_to_ptr.hbm [resolvable:$true] %s141
      %s143 = sshll.u32 [#allocation16], 4
      %s144 = int_to_ptr.vmem [resolvable:$true] %s143
      %149 = dma.hbm_to_vmem [thread:$0]  %s142, 1024, %s144, [#allocation15], 128, 128, 8
    $region53: #{_sslvae_core.1} parent=1 // pred_fallthru
      _
    // Predicated region
    $region54: #{_sslvae_core.1} parent=1 // pred_check
      _
    $region55: #{_sslvae_core.1} parent=1 // pred_check_branch
      %151 = sbr.rel (0) target = $region57
    $region56: #{_sslvae_core.1} parent=1 // pred_region
      _
    $region57: #{_sslvae_core.1} parent=1 // pred_fallthru
      _
    // Predicated region
    $region58: #{_sslvae_core.1} parent=1 // pred_check
      _
    $region59: #{_sslvae_core.1} parent=1 // pred_check_branch
      %153 = sbr.rel (0) target = $region61
    $region60: #{_sslvae_core.1} parent=1 // pred_region
      %155 = dma.done [#allocation3], 640
    $region61: #{_sslvae_core.1} parent=1 // pred_fallthru
      _
    // Predicated region
    $region62: #{_sslvae_core.1} parent=1 // pred_check
      _
    $region63: #{_sslvae_core.1} parent=1 // pred_check_branch
      %157 = sbr.rel (0) target = $region65
    $region64: #{_sslvae_core.1} parent=1 // pred_region
      %159 = dma.done [#allocation6], 2048
    $region65: #{_sslvae_core.1} parent=1 // pred_fallthru
      _
    // Predicated region
    $region66: #{_sslvae_core.1} parent=1 // pred_check
      _
    $region67: #{_sslvae_core.1} parent=1 // pred_check_branch
      %161 = sbr.rel (0) target = $region69
    $region68: #{_sslvae_core.1} parent=1 // pred_region
      %163 = dma.done [#allocation6], 512
    $region69: #{_sslvae_core.1} parent=1 // pred_fallthru
      _
    // Predicated region
    $region70: #{_sslvae_core.1} parent=1 // pred_check
      _
    $region71: #{_sslvae_core.1} parent=1 // pred_check_branch
      %165 = sbr.rel (0) target = $region73
    $region72: #{_sslvae_core.1} parent=1 // pred_region
      %167 = dma.done [#allocation9], 16
    $region73: #{_sslvae_core.1} parent=1 // pred_fallthru
      _
    // Predicated region
    $region74: #{_sslvae_core.1} parent=1 // pred_check
      _
    $region75: #{_sslvae_core.1} parent=1 // pred_check_branch
      %169 = sbr.rel (0) target = $region77
    $region76: #{_sslvae_core.1} parent=1 // pred_region
      %171 = dma.done [#allocation9], 512
    $region77: #{_sslvae_core.1} parent=1 // pred_fallthru
      _
    // Predicated region
    $region78: #{_sslvae_core.1} parent=1 // pred_check
      _
    $region79: #{_sslvae_core.1} parent=1 // pred_check_branch
      %173 = sbr.rel (0) target = $region81
    $region80: #{_sslvae_core.1} parent=1 // pred_region
      %175 = dma.done [#allocation12], 16
    $region81: #{_sslvae_core.1} parent=1 // pred_fallthru
      _
    // Predicated region
    $region82: #{_sslvae_core.1} parent=1 // pred_check
      _
    $region83: #{_sslvae_core.1} parent=1 // pred_check_branch
      %177 = sbr.rel (0) target = $region85
    $region84: #{_sslvae_core.1} parent=1 // pred_region
      %179 = dma.done [#allocation12], 512
    $region85: #{_sslvae_core.1} parent=1 // pred_fallthru
      _
    // Predicated region
    $region86: #{_sslvae_core.1} parent=1 // pred_check
      _
    $region87: #{_sslvae_core.1} parent=1 // pred_check_branch
      %181 = sbr.rel (0) target = $region89
    $region88: #{_sslvae_core.1} parent=1 // pred_region
      %183 = dma.done [#allocation15], 16
    $region89: #{_sslvae_core.1} parent=1 // pred_fallthru
      _
    // Predicated region
    $region90: #{_sslvae_core.1} parent=1 // pred_check
      _
    $region91: #{_sslvae_core.1} parent=1 // pred_check_branch
      %185 = sbr.rel (0) target = $region93
    $region92: #{_sslvae_core.1} parent=1 // pred_region
      %187 = dma.done [#allocation15], 1024
    $region93: #{_sslvae_core.1} parent=1 // pred_fallthru
      _
    %v189 = vld [vmem:[%s0] sm:$0xff]
    %v190 = vld [vmem:[%s1] sm:$0xff]
    %v191 = vld [vmem:[#allocation5] sm:$0xf]
    %v192 = vld [vmem:[#allocation5 + $0x4] sm:$0xf]
    %v193 = vld [vmem:[#allocation5 + $0x8] sm:$0xf]
    %v194 = vld [vmem:[#allocation5 + $0xc] sm:$0xf]
    %v195 = vld [vmem:[#allocation5 + $0x10] sm:$0xf]
    %v196 = vld [vmem:[#allocation5 + $0x14] sm:$0xf]
    %v197 = vld [vmem:[#allocation5 + $0x18] sm:$0xf]
    %v198 = vld [vmem:[#allocation5 + $0x1c] sm:$0xf]
    %v199 = vld [vmem:[#allocation5 + $0x20] sm:$0xf]
    %v200 = vld [vmem:[#allocation5 + $0x24] sm:$0xf]
    %v201 = vld [vmem:[#allocation5 + $0x28] sm:$0xf]
    %v202 = vld [vmem:[#allocation5 + $0x2c] sm:$0xf]
    %v203 = vld [vmem:[#allocation5 + $0x30] sm:$0xf]
    %v204 = vld [vmem:[#allocation5 + $0x34] sm:$0xf]
    %v205 = vld [vmem:[#allocation5 + $0x38] sm:$0xf]
    %v206 = vld [vmem:[#allocation5 + $0x3c] sm:$0xf]
    %v207 = vld [vmem:[#allocation5 + $0x40] sm:$0xf]
    %v208 = vld [vmem:[#allocation5 + $0x44] sm:$0xf]
    %v209 = vld [vmem:[#allocation5 + $0x48] sm:$0xf]
    %v210 = vld [vmem:[#allocation5 + $0x4c] sm:$0xf]
    %v211 = vld [vmem:[#allocation5 + $0x50] sm:$0xf]
    %v212 = vld [vmem:[#allocation5 + $0x54] sm:$0xf]
    %v213 = vld [vmem:[#allocation5 + $0x58] sm:$0xf]
    %v214 = vld [vmem:[#allocation5 + $0x5c] sm:$0xf]
    %v215 = vld [vmem:[#allocation5 + $0x60] sm:$0xf]
    %v216 = vld [vmem:[#allocation5 + $0x64] sm:$0xf]
    %v217 = vld [vmem:[#allocation5 + $0x68] sm:$0xf]
    %v218 = vld [vmem:[#allocation5 + $0x6c] sm:$0xf]
    %v219 = vld [vmem:[#allocation5 + $0x70] sm:$0xf]
    %v220 = vld [vmem:[#allocation5 + $0x74] sm:$0xf]
    %v221 = vld [vmem:[#allocation5 + $0x78] sm:$0xf]
    %v222 = vld [vmem:[#allocation5 + $0x7c] sm:$0xf]
    %v223 = vld [vmem:[%s4] sm:$0x1]
    %v225 = vperm.slane %v223, 0
    %v228 = vunpack.c.l.b16 %v189
    %v229 = vunpack.c.h.b16 %v189
    %v230 = vpack.c.b16 %v228, %v228
    %v231 = vpack.c.b16 %v229, %v229
    %v266 = vunpack.c.l.b16 %v191
    %v267 = vunpack.c.l.b16 %v192
    %v268 = vunpack.c.l.b16 %v193
    %v269 = vunpack.c.l.b16 %v194
    %v270 = vunpack.c.l.b16 %v195
    %v271 = vunpack.c.l.b16 %v196
    %v272 = vunpack.c.l.b16 %v197
    %v273 = vunpack.c.l.b16 %v198
    %v274 = vunpack.c.l.b16 %v199
    %v275 = vunpack.c.l.b16 %v200
    %v276 = vunpack.c.l.b16 %v201
    %v277 = vunpack.c.l.b16 %v202
    %v278 = vunpack.c.l.b16 %v203
    %v279 = vunpack.c.l.b16 %v204
    %v280 = vunpack.c.l.b16 %v205
    %v281 = vunpack.c.l.b16 %v206
    %v282 = vunpack.c.l.b16 %v207
    %v283 = vunpack.c.l.b16 %v208
    %v284 = vunpack.c.l.b16 %v209
    %v285 = vunpack.c.l.b16 %v210
    %v286 = vunpack.c.l.b16 %v211
    %v287 = vunpack.c.l.b16 %v212
    %v288 = vunpack.c.l.b16 %v213
    %v289 = vunpack.c.l.b16 %v214
    %v290 = vunpack.c.l.b16 %v215
    %v291 = vunpack.c.l.b16 %v216
    %v292 = vunpack.c.l.b16 %v217
    %v293 = vunpack.c.l.b16 %v218
    %v294 = vunpack.c.l.b16 %v219
    %v295 = vunpack.c.l.b16 %v220
    %v296 = vunpack.c.l.b16 %v221
    %v297 = vunpack.c.l.b16 %v222
    %v298 = vpack.c.b16 %v267, %v266
    %v299 = vpack.c.b16 %v269, %v268
    %v300 = vpack.c.b16 %v271, %v270
    %v301 = vpack.c.b16 %v273, %v272
    %v302 = vpack.c.b16 %v275, %v274
    %v303 = vpack.c.b16 %v277, %v276
    %v304 = vpack.c.b16 %v279, %v278
    %v305 = vpack.c.b16 %v281, %v280
    %v306 = vpack.c.b16 %v283, %v282
    %v307 = vpack.c.b16 %v285, %v284
    %v308 = vpack.c.b16 %v287, %v286
    %v309 = vpack.c.b16 %v289, %v288
    %v310 = vpack.c.b16 %v291, %v290
    %v311 = vpack.c.b16 %v293, %v292
    %v312 = vpack.c.b16 %v295, %v294
    %v313 = vpack.c.b16 %v297, %v296
    %330 = vmatpush.bf16.msra.mxu0 %v305
    %331 = vmatpush.bf16.msra.mxu0 %v304
    %332 = vmatpush.bf16.msra.mxu0 %v303
    %333 = vmatpush.bf16.msra.mxu0 %v302
    %334 = vmatpush.bf16.msra.mxu0 %v301
    %335 = vmatpush.bf16.msra.mxu0 %v300
    %336 = vmatpush.bf16.msra.mxu0 %v299
    %337 = vmatpush.bf16.msra.mxu0 %v298
    %338 = vmatmul.bf16.gmra.mxu0 %v230
    %v339 = vpop.f32.mrf.mxu0
    %v340 = vadd.f32 %v225, %v339
    %v341 = vpop.f32.mrf.mxu0
    %342 = vdwg.mxu0
    %343 = vmatpush.bf16.msra.mxu0 %v313
    %344 = vmatpush.bf16.msra.mxu0 %v312
    %345 = vmatpush.bf16.msra.mxu0 %v311
    %346 = vmatpush.bf16.msra.mxu0 %v310
    %347 = vmatpush.bf16.msra.mxu0 %v309
    %348 = vmatpush.bf16.msra.mxu0 %v308
    %349 = vmatpush.bf16.msra.mxu0 %v307
    %350 = vmatpush.bf16.msra.mxu0 %v306
    %351 = vmatmul.bf16.gmra.mxu0 %v231
    %v352 = vpop.f32.mrf.mxu0
    %v353 = vadd.f32 %v340, %v352
    %v354 = vpop.f32.mrf.mxu0
    %355 = vdwg.mxu0
    %v356 = vmax.f32 %v353, 0.0
    %v357 = vpack.c.bf16 %v356, %v356
    %v358 = vld [vmem:[#allocation7] sm:$0xf]
    %v359 = vld [vmem:[#allocation7 + $0x4] sm:$0xf]
    %v360 = vld [vmem:[#allocation7 + $0x8] sm:$0xf]
    %v361 = vld [vmem:[#allocation7 + $0xc] sm:$0xf]
    %v362 = vld [vmem:[#allocation7 + $0x10] sm:$0xf]
    %v363 = vld [vmem:[#allocation7 + $0x14] sm:$0xf]
    %v364 = vld [vmem:[#allocation7 + $0x18] sm:$0xf]
    %v365 = vld [vmem:[#allocation7 + $0x1c] sm:$0xf]
    %v366 = vld [vmem:[#allocation8] sm:$0x1]
    %v368 = vperm.slane %v366, 0
    %v378 = vunpack.c.l.b16 %v358
    %v379 = vunpack.c.l.b16 %v359
    %v380 = vunpack.c.l.b16 %v360
    %v381 = vunpack.c.l.b16 %v361
    %v382 = vunpack.c.l.b16 %v362
    %v383 = vunpack.c.l.b16 %v363
    %v384 = vunpack.c.l.b16 %v364
    %v385 = vunpack.c.l.b16 %v365
    %v386 = vpack.c.b16 %v379, %v378
    %v387 = vpack.c.b16 %v381, %v380
    %v388 = vpack.c.b16 %v383, %v382
    %v389 = vpack.c.b16 %v385, %v384
    %vm394 = vcmask 523264
    %v396 = vsel %vm394, %v357, 0
    %398 = vmatpush.bf16.msra.mxu0 0
    %399 = vmatpush.bf16.msra.mxu0 0
    %400 = vmatpush.bf16.msra.mxu0 0
    %401 = vmatpush.bf16.msra.mxu0 0
    %402 = vmatpush.bf16.msra.mxu0 %v389
    %403 = vmatpush.bf16.msra.mxu0 %v388
    %404 = vmatpush.bf16.msra.mxu0 %v387
    %405 = vmatpush.bf16.msra.mxu0 %v386
    %406 = vmatmul.bf16.gmra.mxu0 %v396
    %v407 = vpop.f32.mrf.mxu0
    %v408 = vadd.f32 %v368, %v407
    %v409 = vpop.f32.mrf.mxu0
    %410 = vdwg.mxu0
    %v411 = vld [vmem:[%s7] sm:$0xf]
    %vm412 = vcmask 31744
    %v414 = vsel %vm412, %v190, 0
    %vm416 = vcmask 1043456
    %v418 = vsel %vm416, %v411, 0
    %420 = vmatpush.msra.mxu0 0.0
    %421 = vmatpush.msra.mxu0 0.0
    %422 = vmatpush.msra.mxu0 0.0
    %423 = vmatpush.msra.mxu0 0.0
    %424 = vmatpush.msra.mxu0 0.0
    %425 = vmatpush.msra.mxu0 0.0
    %426 = vmatpush.msra.mxu0 0.0
    %427 = vmatpush.msra.mxu0 0.0
    %428 = vmatpush.msra.mxu0 0.0
    %429 = vmatpush.msra.mxu0 0.0
    %430 = vmatpush.msra.mxu0 0.0
    %431 = vmatpush.msra.mxu0 0.0
    %432 = vmatpush.msra.mxu0 0.0
    %433 = vmatpush.msra.mxu0 0.0
    %434 = vmatpush.msra.mxu0 0.0
    %435 = vmatpush.msra.mxu0 %v418
    %436 = vmatmul.f32.gmra.mxu0 %v414
    %v437 = vpop.f32.mrf.mxu0
    %v438 = vadd.f32 0.0, %v437
    %439 = vdwg.mxu0
    %441 = vrot.lane.b32.xlu0 %v438, 64
    %v442 = vpop.permute.xlu0 %441
    %v444 = vadd.f32 %v353, %v442
    %v445 = vmax.f32 %v444, 0.0
    %v446 = vperm.slane %v411, 0
    %448 = vrot.lane.b32.xlu0 %v446, 64
    %v449 = vpop.permute.xlu0 %448
    %v451 = vadd.f32 %v353, %v449
    %v452 = vmax.f32 %v451, 0.0
    %v453 = vperm.slane %v411, 1
    %455 = vrot.lane.b32.xlu0 %v453, 64
    %v456 = vpop.permute.xlu0 %455
    %v458 = vadd.f32 %v353, %v456
    %v459 = vmax.f32 %v458, 0.0
    %v460 = vperm.slane %v411, 2
    %462 = vrot.lane.b32.xlu0 %v460, 64
    %v463 = vpop.permute.xlu0 %462
    %v465 = vadd.f32 %v353, %v463
    %v466 = vmax.f32 %v465, 0.0
    %v467 = vperm.slane %v411, 3
    %469 = vrot.lane.b32.xlu0 %v467, 64
    %v470 = vpop.permute.xlu0 %469
    %v472 = vadd.f32 %v353, %v470
    %v473 = vmax.f32 %v472, 0.0
    %v474 = vld [vmem:[#allocation2] sm:$0xff]
    %v475 = vld [vmem:[#allocation2 + $0x8] sm:$0xff]
    %v476 = vld [vmem:[#allocation2 + $0x10] sm:$0xff]
    %v477 = vld [vmem:[#allocation2 + $0x18] sm:$0xff]
    %v478 = vld [vmem:[#allocation2 + $0x20] sm:$0xff]
    %v479 = vpack.c.bf16 %v452, %v445
    %v480 = vpack.c.bf16 %v466, %v459
    %v481 = vpack.c.bf16 %v473, %v473
    %v482 = vld [vmem:[#allocation10] sm:$0xf]
    %v483 = vld [vmem:[#allocation10 + $0x4] sm:$0xf]
    %v484 = vld [vmem:[#allocation10 + $0x8] sm:$0xf]
    %v485 = vld [vmem:[#allocation10 + $0xc] sm:$0xf]
    %v486 = vld [vmem:[#allocation10 + $0x10] sm:$0xf]
    %v487 = vld [vmem:[#allocation10 + $0x14] sm:$0xf]
    %v488 = vld [vmem:[#allocation10 + $0x18] sm:$0xf]
    %v489 = vld [vmem:[#allocation10 + $0x1c] sm:$0xf]
    %v490 = vld [vmem:[#allocation11] sm:$0x1]
    %v492 = vperm.slane %v490, 0
    %497 = vrot.lane.b32.xlu0 %v479, 64
    %v498 = vpop.permute.xlu0 %497
    %499 = vrot.lane.b32.xlu0 %v480, 64
    %v500 = vpop.permute.xlu0 %499
    %501 = vrot.lane.b32.xlu0 %v481, 64
    %v502 = vpop.permute.xlu0 %501
    %v511 = vunpack.c.l.b16 %v482
    %v512 = vunpack.c.l.b16 %v483
    %v513 = vunpack.c.l.b16 %v484
    %v514 = vunpack.c.l.b16 %v485
    %v515 = vunpack.c.l.b16 %v486
    %v516 = vunpack.c.l.b16 %v487
    %v517 = vunpack.c.l.b16 %v488
    %v518 = vunpack.c.l.b16 %v489
    %v519 = vpack.c.b16 %v512, %v511
    %v520 = vpack.c.b16 %v514, %v513
    %v521 = vpack.c.b16 %v516, %v515
    %v522 = vpack.c.b16 %v518, %v517
    %v528 = vsel %vm394, %v498, 0
    %v531 = vsel %vm394, %v500, 0
    %v534 = vsel %vm394, %v502, 0
    %536 = vmatpush.bf16.msra.mxu0 0
    %537 = vmatpush.bf16.msra.mxu0 0
    %538 = vmatpush.bf16.msra.mxu0 0
    %539 = vmatpush.bf16.msra.mxu0 0
    %540 = vmatpush.bf16.msra.mxu0 %v522
    %541 = vmatpush.bf16.msra.mxu0 %v521
    %542 = vmatpush.bf16.msra.mxu0 %v520
    %543 = vmatpush.bf16.msra.mxu0 %v519
    %544 = vmatmul.bf16.gmra.mxu0 %v528
    %v545 = vpop.f32.mrf.mxu0
    %v546 = vadd.f32 %v492, %v545
    %v547 = vpop.f32.mrf.mxu0
    %v548 = vadd.f32 %v492, %v547
    %549 = vmatmul.bf16.gmra.mxu0 %v531
    %v550 = vpop.f32.mrf.mxu0
    %v551 = vadd.f32 %v492, %v550
    %v552 = vpop.f32.mrf.mxu0
    %v553 = vadd.f32 %v492, %v552
    %554 = vmatmul.bf16.gmra.mxu0 %v534
    %v555 = vpop.f32.mrf.mxu0
    %v556 = vadd.f32 %v492, %v555
    %v557 = vpop.f32.mrf.mxu0
    %558 = vdwg.mxu0
    %v559 = vmul.f32 %v546, 0.5
    %v560 = vmul.f32 %v548, 0.5
    %v561 = vmul.f32 %v551, 0.5
    %v562 = vmul.f32 %v553, 0.5
    %v563 = vmul.f32 %v556, 0.5
    %v564 = vmul.f32 %v559, 1.442695
    %v565 = vpow.pop %v564
    %v566 = vmul.f32 %v560, 1.442695
    %v567 = vpow.pop %v566
    %v568 = vmul.f32 %v561, 1.442695
    %v569 = vpow.pop %v568
    %v570 = vmul.f32 %v562, 1.442695
    %v571 = vpow.pop %v570
    %v572 = vmul.f32 %v563, 1.442695
    %v573 = vpow.pop %v572
    %579 = vrot.lane.b32.xlu0 %v474, 64
    %v580 = vpop.permute.xlu0 %579
    %581 = vrot.lane.b32.xlu0 %v475, 64
    %v582 = vpop.permute.xlu0 %581
    %583 = vrot.lane.b32.xlu0 %v476, 64
    %v584 = vpop.permute.xlu0 %583
    %585 = vrot.lane.b32.xlu0 %v477, 64
    %v586 = vpop.permute.xlu0 %585
    %587 = vrot.lane.b32.xlu0 %v478, 64
    %v588 = vpop.permute.xlu0 %587
    %v594 = vmul.f32 %v565, %v580
    %v595 = vmul.f32 %v567, %v582
    %v596 = vmul.f32 %v569, %v584
    %v597 = vmul.f32 %v571, %v586
    %v598 = vmul.f32 %v573, %v588
    %604 = vrot.lane.b32.xlu0 %v594, 64
    %v605 = vpop.permute.xlu0 %604
    %606 = vrot.lane.b32.xlu0 %v595, 64
    %v607 = vpop.permute.xlu0 %606
    %608 = vrot.lane.b32.xlu0 %v596, 64
    %v609 = vpop.permute.xlu0 %608
    %610 = vrot.lane.b32.xlu0 %v597, 64
    %v611 = vpop.permute.xlu0 %610
    %612 = vrot.lane.b32.xlu0 %v598, 64
    %v613 = vpop.permute.xlu0 %612
    %v619 = vadd.f32 %v546, %v605
    %v620 = vadd.f32 %v548, %v607
    %v621 = vadd.f32 %v551, %v609
    %v622 = vadd.f32 %v553, %v611
    %v623 = vadd.f32 %v556, %v613
    %v624 = vpack.c.bf16 %v620, %v619
    %v625 = vpack.c.bf16 %v622, %v621
    %v626 = vpack.c.bf16 %v623, %v623
    %v627 = vld [vmem:[#allocation13] sm:$0xf]
    %v628 = vld [vmem:[#allocation13 + $0x4] sm:$0xf]
    %v629 = vld [vmem:[#allocation13 + $0x8] sm:$0xf]
    %v630 = vld [vmem:[#allocation13 + $0xc] sm:$0xf]
    %v631 = vld [vmem:[#allocation13 + $0x10] sm:$0xf]
    %v632 = vld [vmem:[#allocation13 + $0x14] sm:$0xf]
    %v633 = vld [vmem:[#allocation13 + $0x18] sm:$0xf]
    %v634 = vld [vmem:[#allocation13 + $0x1c] sm:$0xf]
    %v643 = vunpack.c.l.b16 %v627
    %v644 = vunpack.c.l.b16 %v628
    %v645 = vunpack.c.l.b16 %v629
    %v646 = vunpack.c.l.b16 %v630
    %v647 = vunpack.c.l.b16 %v631
    %v648 = vunpack.c.l.b16 %v632
    %v649 = vunpack.c.l.b16 %v633
    %v650 = vunpack.c.l.b16 %v634
    %v651 = vpack.c.b16 %v644, %v643
    %v652 = vpack.c.b16 %v646, %v645
    %v653 = vpack.c.b16 %v648, %v647
    %v654 = vpack.c.b16 %v650, %v649
    %v660 = vsel %vm394, %v624, 0
    %v663 = vsel %vm394, %v625, 0
    %v666 = vsel %vm394, %v626, 0
    %668 = vmatpush.bf16.msra.mxu0 0
    %669 = vmatpush.bf16.msra.mxu0 0
    %670 = vmatpush.bf16.msra.mxu0 0
    %671 = vmatpush.bf16.msra.mxu0 0
    %672 = vmatpush.bf16.msra.mxu0 %v654
    %673 = vmatpush.bf16.msra.mxu0 %v653
    %674 = vmatpush.bf16.msra.mxu0 %v652
    %675 = vmatpush.bf16.msra.mxu0 %v651
    %676 = vmatmul.bf16.gmra.mxu0 %v660
    %v677 = vpop.f32.mrf.mxu0
    %v678 = vadd.f32 %v442, %v677
    %v679 = vpop.f32.mrf.mxu0
    %v680 = vadd.f32 %v449, %v679
    %681 = vmatmul.bf16.gmra.mxu0 %v663
    %v682 = vpop.f32.mrf.mxu0
    %v683 = vadd.f32 %v456, %v682
    %v684 = vpop.f32.mrf.mxu0
    %v685 = vadd.f32 %v463, %v684
    %686 = vmatmul.bf16.gmra.mxu0 %v666
    %v687 = vpop.f32.mrf.mxu0
    %v688 = vadd.f32 %v470, %v687
    %v689 = vpop.f32.mrf.mxu0
    %690 = vdwg.mxu0
    %v691 = vld [vmem:[#allocation14] sm:$0x1]
    %v693 = vperm.slane %v691, 0
    %v695 = vadd.f32 %v678, %v693
    %v696 = vadd.f32 %v680, %v693
    %v697 = vadd.f32 %v683, %v693
    %v698 = vadd.f32 %v685, %v693
    %v699 = vadd.f32 %v688, %v693
    %v700 = vmax.f32 %v695, 0.0
    %v701 = vmax.f32 %v696, 0.0
    %v702 = vmax.f32 %v697, 0.0
    %v703 = vmax.f32 %v698, 0.0
    %v704 = vmax.f32 %v699, 0.0
    %v705 = vpack.c.bf16 %v701, %v700
    %v706 = vpack.c.bf16 %v703, %v702
    %v707 = vpack.c.bf16 %v704, %v704
    %v708 = vld [vmem:[#allocation16] sm:$0xff]
    %v709 = vld [vmem:[#allocation16 + $0x8] sm:$0xff]
    %v710 = vld [vmem:[#allocation16 + $0x10] sm:$0xff]
    %v711 = vld [vmem:[#allocation16 + $0x18] sm:$0xff]
    %v712 = vld [vmem:[#allocation16 + $0x20] sm:$0xff]
    %v713 = vld [vmem:[#allocation16 + $0x28] sm:$0xff]
    %v714 = vld [vmem:[#allocation16 + $0x30] sm:$0xff]
    %v715 = vld [vmem:[#allocation16 + $0x38] sm:$0xff]
    %v716 = vld [vmem:[%s13] sm:$0x3]
    %v718 = vperm.slane %v716, 0
    %v719 = vperm.slane %v716, 1
    %v730 = vunpack.c.l.b16 %v708
    %v731 = vunpack.c.h.b16 %v708
    %v732 = vunpack.c.l.b16 %v709
    %v733 = vunpack.c.h.b16 %v709
    %v734 = vunpack.c.l.b16 %v710
    %v735 = vunpack.c.h.b16 %v710
    %v736 = vunpack.c.l.b16 %v711
    %v737 = vunpack.c.h.b16 %v711
    %v738 = vunpack.c.l.b16 %v712
    %v739 = vunpack.c.h.b16 %v712
    %v740 = vunpack.c.l.b16 %v713
    %v741 = vunpack.c.h.b16 %v713
    %v742 = vunpack.c.l.b16 %v714
    %v743 = vunpack.c.h.b16 %v714
    %v744 = vunpack.c.l.b16 %v715
    %v745 = vunpack.c.h.b16 %v715
    %v746 = vpack.c.b16 %v732, %v730
    %v747 = vpack.c.b16 %v733, %v731
    %v748 = vpack.c.b16 %v736, %v734
    %v749 = vpack.c.b16 %v737, %v735
    %v750 = vpack.c.b16 %v740, %v738
    %v751 = vpack.c.b16 %v741, %v739
    %v752 = vpack.c.b16 %v744, %v742
    %v753 = vpack.c.b16 %v745, %v743
    %v763 = vsel %vm394, %v705, 0
    %v766 = vsel %vm394, %v706, 0
    %v769 = vsel %vm394, %v707, 0
    %771 = vmatpush.bf16.msra.mxu0 0
    %772 = vmatpush.bf16.msra.mxu0 0
    %773 = vmatpush.bf16.msra.mxu0 0
    %774 = vmatpush.bf16.msra.mxu0 0
    %775 = vmatpush.bf16.msra.mxu0 %v752
    %776 = vmatpush.bf16.msra.mxu0 %v750
    %777 = vmatpush.bf16.msra.mxu0 %v748
    %778 = vmatpush.bf16.msra.mxu0 %v746
    %779 = vmatmul.bf16.gmra.mxu0 %v763
    %v780 = vpop.f32.mrf.mxu0
    %v781 = vadd.f32 %v718, %v780
    %v782 = vpop.f32.mrf.mxu0
    %v783 = vadd.f32 %v718, %v782
    %784 = vmatmul.bf16.gmra.mxu0 %v766
    %v785 = vpop.f32.mrf.mxu0
    %v786 = vadd.f32 %v718, %v785
    %v787 = vpop.f32.mrf.mxu0
    %v788 = vadd.f32 %v718, %v787
    %789 = vmatmul.bf16.gmra.mxu0 %v769
    %v790 = vpop.f32.mrf.mxu0
    %v791 = vadd.f32 %v718, %v790
    %v792 = vpop.f32.mrf.mxu0
    %793 = vdwg.mxu0
    %794 = vmatpush.bf16.msra.mxu0 0
    %795 = vmatpush.bf16.msra.mxu0 0
    %796 = vmatpush.bf16.msra.mxu0 0
    %797 = vmatpush.bf16.msra.mxu0 0
    %798 = vmatpush.bf16.msra.mxu0 %v753
    %799 = vmatpush.bf16.msra.mxu0 %v751
    %800 = vmatpush.bf16.msra.mxu0 %v749
    %801 = vmatpush.bf16.msra.mxu0 %v747
    %802 = vmatmul.bf16.gmra.mxu0 %v763
    %v803 = vpop.f32.mrf.mxu0
    %v804 = vadd.f32 %v719, %v803
    %v805 = vpop.f32.mrf.mxu0
    %v806 = vadd.f32 %v719, %v805
    %807 = vmatmul.bf16.gmra.mxu0 %v766
    %v808 = vpop.f32.mrf.mxu0
    %v809 = vadd.f32 %v719, %v808
    %v810 = vpop.f32.mrf.mxu0
    %v811 = vadd.f32 %v719, %v810
    %812 = vmatmul.bf16.gmra.mxu0 %v769
    %v813 = vpop.f32.mrf.mxu0
    %v814 = vadd.f32 %v719, %v813
    %v815 = vpop.f32.mrf.mxu0
    %816 = vdwg.mxu0
    %v817 = vxor.u32 %v781, 2147483648
    %v818 = vxor.u32 %v804, 2147483648
    %v819 = vxor.u32 %v783, 2147483648
    %v820 = vxor.u32 %v806, 2147483648
    %v821 = vxor.u32 %v786, 2147483648
    %v822 = vxor.u32 %v809, 2147483648
    %v823 = vxor.u32 %v788, 2147483648
    %v824 = vxor.u32 %v811, 2147483648
    %v825 = vxor.u32 %v791, 2147483648
    %v826 = vxor.u32 %v814, 2147483648
    %v827 = vmul.f32 %v817, 1.442695
    %v828 = vpow.pop %v827
    %v829 = vmul.f32 %v818, 1.442695
    %v830 = vpow.pop %v829
    %v831 = vmul.f32 %v819, 1.442695
    %v832 = vpow.pop %v831
    %v833 = vmul.f32 %v820, 1.442695
    %v834 = vpow.pop %v833
    %v835 = vmul.f32 %v821, 1.442695
    %v836 = vpow.pop %v835
    %v837 = vmul.f32 %v822, 1.442695
    %v838 = vpow.pop %v837
    %v839 = vmul.f32 %v823, 1.442695
    %v840 = vpow.pop %v839
    %v841 = vmul.f32 %v824, 1.442695
    %v842 = vpow.pop %v841
    %v843 = vmul.f32 %v825, 1.442695
    %v844 = vpow.pop %v843
    %v845 = vmul.f32 %v826, 1.442695
    %v846 = vpow.pop %v845
    %v847 = vadd.f32 %v828, 1.0
    %v848 = vadd.f32 %v830, 1.0
    %v849 = vadd.f32 %v832, 1.0
    %v850 = vadd.f32 %v834, 1.0
    %v851 = vadd.f32 %v836, 1.0
    %v852 = vadd.f32 %v838, 1.0
    %v853 = vadd.f32 %v840, 1.0
    %v854 = vadd.f32 %v842, 1.0
    %v855 = vadd.f32 %v844, 1.0
    %v856 = vadd.f32 %v846, 1.0
    %v857 = vrcp.pop %v847
    %v858 = vmul.f32 %v847, %v857
    %v859 = vsub.f32 1.0, %v858
    %v860 = vmul.f32 %v857, %v859
    %v861 = vadd.f32 %v857, %v860
    %vm862 = vweird.f32 %v847
    %vm863 = vweird.f32 %v857
    %vm864 = vmor %vm862, %vm863
    %v865 = vsel %vm864, %v857, %v861
    %v866 = vand.u32 2147483647, %v847
    %vm867 = vcmp.eq.f32.partialorder %v866, 8.507059e+37
    %v868 = vand.u32 %v847, 2147483648
    %v869 = vor.u32 1.1754944e-38, %v868
    %v870 = vsel %vm867, %v869, %v865
    %v871 = vmul.f32 1.0, %v870
    %v872 = vrcp.pop %v848
    %v873 = vmul.f32 %v848, %v872
    %v874 = vsub.f32 1.0, %v873
    %v875 = vmul.f32 %v872, %v874
    %v876 = vadd.f32 %v872, %v875
    %vm877 = vweird.f32 %v848
    %vm878 = vweird.f32 %v872
    %vm879 = vmor %vm877, %vm878
    %v880 = vsel %vm879, %v872, %v876
    %v881 = vand.u32 2147483647, %v848
    %vm882 = vcmp.eq.f32.partialorder %v881, 8.507059e+37
    %v883 = vand.u32 %v848, 2147483648
    %v884 = vor.u32 1.1754944e-38, %v883
    %v885 = vsel %vm882, %v884, %v880
    %v886 = vmul.f32 1.0, %v885
    %v887 = vrcp.pop %v849
    %v888 = vmul.f32 %v849, %v887
    %v889 = vsub.f32 1.0, %v888
    %v890 = vmul.f32 %v887, %v889
    %v891 = vadd.f32 %v887, %v890
    %vm892 = vweird.f32 %v849
    %vm893 = vweird.f32 %v887
    %vm894 = vmor %vm892, %vm893
    %v895 = vsel %vm894, %v887, %v891
    %v896 = vand.u32 2147483647, %v849
    %vm897 = vcmp.eq.f32.partialorder %v896, 8.507059e+37
    %v898 = vand.u32 %v849, 2147483648
    %v899 = vor.u32 1.1754944e-38, %v898
    %v900 = vsel %vm897, %v899, %v895
    %v901 = vmul.f32 1.0, %v900
    %v902 = vrcp.pop %v850
    %v903 = vmul.f32 %v850, %v902
    %v904 = vsub.f32 1.0, %v903
    %v905 = vmul.f32 %v902, %v904
    %v906 = vadd.f32 %v902, %v905
    %vm907 = vweird.f32 %v850
    %vm908 = vweird.f32 %v902
    %vm909 = vmor %vm907, %vm908
    %v910 = vsel %vm909, %v902, %v906
    %v911 = vand.u32 2147483647, %v850
    %vm912 = vcmp.eq.f32.partialorder %v911, 8.507059e+37
    %v913 = vand.u32 %v850, 2147483648
    %v914 = vor.u32 1.1754944e-38, %v913
    %v915 = vsel %vm912, %v914, %v910
    %v916 = vmul.f32 1.0, %v915
    %v917 = vrcp.pop %v851
    %v918 = vmul.f32 %v851, %v917
    %v919 = vsub.f32 1.0, %v918
    %v920 = vmul.f32 %v917, %v919
    %v921 = vadd.f32 %v917, %v920
    %vm922 = vweird.f32 %v851
    %vm923 = vweird.f32 %v917
    %vm924 = vmor %vm922, %vm923
    %v925 = vsel %vm924, %v917, %v921
    %v926 = vand.u32 2147483647, %v851
    %vm927 = vcmp.eq.f32.partialorder %v926, 8.507059e+37
    %v928 = vand.u32 %v851, 2147483648
    %v929 = vor.u32 1.1754944e-38, %v928
    %v930 = vsel %vm927, %v929, %v925
    %v931 = vmul.f32 1.0, %v930
    %v932 = vrcp.pop %v852
    %v933 = vmul.f32 %v852, %v932
    %v934 = vsub.f32 1.0, %v933
    %v935 = vmul.f32 %v932, %v934
    %v936 = vadd.f32 %v932, %v935
    %vm937 = vweird.f32 %v852
    %vm938 = vweird.f32 %v932
    %vm939 = vmor %vm937, %vm938
    %v940 = vsel %vm939, %v932, %v936
    %v941 = vand.u32 2147483647, %v852
    %vm942 = vcmp.eq.f32.partialorder %v941, 8.507059e+37
    %v943 = vand.u32 %v852, 2147483648
    %v944 = vor.u32 1.1754944e-38, %v943
    %v945 = vsel %vm942, %v944, %v940
    %v946 = vmul.f32 1.0, %v945
    %v947 = vrcp.pop %v853
    %v948 = vmul.f32 %v853, %v947
    %v949 = vsub.f32 1.0, %v948
    %v950 = vmul.f32 %v947, %v949
    %v951 = vadd.f32 %v947, %v950
    %vm952 = vweird.f32 %v853
    %vm953 = vweird.f32 %v947
    %vm954 = vmor %vm952, %vm953
    %v955 = vsel %vm954, %v947, %v951
    %v956 = vand.u32 2147483647, %v853
    %vm957 = vcmp.eq.f32.partialorder %v956, 8.507059e+37
    %v958 = vand.u32 %v853, 2147483648
    %v959 = vor.u32 1.1754944e-38, %v958
    %v960 = vsel %vm957, %v959, %v955
    %v961 = vmul.f32 1.0, %v960
    %v962 = vrcp.pop %v854
    %v963 = vmul.f32 %v854, %v962
    %v964 = vsub.f32 1.0, %v963
    %v965 = vmul.f32 %v962, %v964
    %v966 = vadd.f32 %v962, %v965
    %vm967 = vweird.f32 %v854
    %vm968 = vweird.f32 %v962
    %vm969 = vmor %vm967, %vm968
    %v970 = vsel %vm969, %v962, %v966
    %v971 = vand.u32 2147483647, %v854
    %vm972 = vcmp.eq.f32.partialorder %v971, 8.507059e+37
    %v973 = vand.u32 %v854, 2147483648
    %v974 = vor.u32 1.1754944e-38, %v973
    %v975 = vsel %vm972, %v974, %v970
    %v976 = vmul.f32 1.0, %v975
    %v977 = vrcp.pop %v855
    %v978 = vmul.f32 %v855, %v977
    %v979 = vsub.f32 1.0, %v978
    %v980 = vmul.f32 %v977, %v979
    %v981 = vadd.f32 %v977, %v980
    %vm982 = vweird.f32 %v855
    %vm983 = vweird.f32 %v977
    %vm984 = vmor %vm982, %vm983
    %v985 = vsel %vm984, %v977, %v981
    %v986 = vand.u32 2147483647, %v855
    %vm987 = vcmp.eq.f32.partialorder %v986, 8.507059e+37
    %v988 = vand.u32 %v855, 2147483648
    %v989 = vor.u32 1.1754944e-38, %v988
    %v990 = vsel %vm987, %v989, %v985
    %v991 = vmul.f32 1.0, %v990
    %v992 = vrcp.pop %v856
    %v993 = vmul.f32 %v856, %v992
    %v994 = vsub.f32 1.0, %v993
    %v995 = vmul.f32 %v992, %v994
    %v996 = vadd.f32 %v992, %v995
    %vm997 = vweird.f32 %v856
    %vm998 = vweird.f32 %v992
    %vm999 = vmor %vm997, %vm998
    %v1000 = vsel %vm999, %v992, %v996
    %v1001 = vand.u32 2147483647, %v856
    %vm1002 = vcmp.eq.f32.partialorder %v1001, 8.507059e+37
    %v1003 = vand.u32 %v856, 2147483648
    %v1004 = vor.u32 1.1754944e-38, %v1003
    %v1005 = vsel %vm1002, %v1004, %v1000
    %v1006 = vmul.f32 1.0, %v1005
    %1007 = vst [vmem:[#allocation17] sm:$0xff] %v546
    %1008 = vst [vmem:[#allocation17 + $0x8] sm:$0xff] %v408
    %v1009 = vpack.c.bf16 %v886, %v871
    %1010 = vst [vmem:[#allocation18] sm:$0xff] %v1009
    %1011 = vst [vmem:[#allocation20] sm:$0xff] %v548
    %v1012 = vpack.c.bf16 %v916, %v901
    %1013 = vst [vmem:[#allocation21] sm:$0xff] %v1012
    %1014 = vst [vmem:[#allocation20 + $0x8] sm:$0xff] %v551
    %v1015 = vpack.c.bf16 %v946, %v931
    %1016 = vst [vmem:[#allocation21 + $0x8] sm:$0xff] %v1015
    %1017 = vst [vmem:[#allocation20 + $0x10] sm:$0xff] %v553
    %v1018 = vpack.c.bf16 %v976, %v961
    %1019 = vst [vmem:[#allocation21 + $0x10] sm:$0xff] %v1018
    %1020 = vst [vmem:[#allocation20 + $0x18] sm:$0xff] %v556
    %v1021 = vpack.c.bf16 %v1006, %v991
    %1022 = vst [vmem:[#allocation21 + $0x18] sm:$0xff] %v1021
    // Predicated region
    $region94: #{_sslvae_core.1} parent=1 // pred_check
      _
    $region95: #{_sslvae_core.1} parent=1 // pred_check_branch
      %1024 = sbr.rel (0) target = $region97
    $region96: #{_sslvae_core.1} parent=1 // pred_region
      %1026 = vsyncadd [#allocation4], 0
      %s1028 = sshll.u32 [#allocation17], 4
      %s1029 = int_to_ptr.vmem [resolvable:$true] %s1028
      %s1030 = sshll.u32 %s14, 4
      %s1031 = int_to_ptr.hbm [resolvable:$true] %s1030
      %1033 = dma.vmem_to_hbm [thread:$0]  %s1029, 256, %s1031, [#allocation4]
    $region97: #{_sslvae_core.1} parent=1 // pred_fallthru
      _
    // Predicated region
    $region98: #{_sslvae_core.1} parent=1 // pred_check
      _
    $region99: #{_sslvae_core.1} parent=1 // pred_check_branch
      %1035 = sbr.rel (0) target = $region101
    $region100: #{_sslvae_core.1} parent=1 // pred_region
      %1037 = vsyncadd [#allocation19], 0
      %s1039 = sshll.u32 [#allocation18], 4
      %s1040 = int_to_ptr.vmem [resolvable:$true] %s1039
      %s1041 = sshll.u32 %s15, 4
      %s1042 = int_to_ptr.hbm [resolvable:$true] %s1041
      %1044 = dma.vmem_to_hbm [thread:$0]  %s1040, 128, %s1042, [#allocation19]
    $region101: #{_sslvae_core.1} parent=1 // pred_fallthru
      _
    // Predicated region
    $region102: #{_sslvae_core.1} parent=1 // pred_check
      _
    $region103: #{_sslvae_core.1} parent=1 // pred_check_branch
      %1046 = sbr.rel (0) target = $region105
    $region104: #{_sslvae_core.1} parent=1 // pred_region
      %1048 = vsyncadd [#allocation19], 0
      %s1050 = sshll.u32 [#allocation20], 4
      %s1051 = int_to_ptr.vmem [resolvable:$true] %s1050
      %s1052 = sshll.u32 %s16, 4
      %s1053 = int_to_ptr.hbm [resolvable:$true] %s1052
      %1055 = dma.vmem_to_hbm [thread:$0]  %s1051, 512, %s1053, [#allocation19]
    $region105: #{_sslvae_core.1} parent=1 // pred_fallthru
      _
    // Predicated region
    $region106: #{_sslvae_core.1} parent=1 // pred_check
      _
    $region107: #{_sslvae_core.1} parent=1 // pred_check_branch
      %1057 = sbr.rel (0) target = $region109
    $region108: #{_sslvae_core.1} parent=1 // pred_region
      %1059 = vsyncadd [#allocation22], 0
      %s1061 = sshll.u32 [#allocation21], 4
      %s1062 = int_to_ptr.vmem [resolvable:$true] %s1061
      %s1063 = sshll.u32 %s17, 4
      %s1064 = int_to_ptr.hbm [resolvable:$true] %s1063
      %1066 = dma.vmem_to_hbm [thread:$0]  %s1062, 512, %s1064, [#allocation22]
    $region109: #{_sslvae_core.1} parent=1 // pred_fallthru
      _
    // Predicated region
    $region110: #{_sslvae_core.1} parent=1 // pred_check
      _
    $region111: #{_sslvae_core.1} parent=1 // pred_check_branch
      %1068 = sbr.rel (0) target = $region113
    $region112: #{_sslvae_core.1} parent=1 // pred_region
      %1070 = dma.done [#allocation4], 256
    $region113: #{_sslvae_core.1} parent=1 // pred_fallthru
      _
    // Predicated region
    $region114: #{_sslvae_core.1} parent=1 // pred_check
      _
    $region115: #{_sslvae_core.1} parent=1 // pred_check_branch
      %1072 = sbr.rel (0) target = $region117
    $region116: #{_sslvae_core.1} parent=1 // pred_region
      %1074 = dma.done [#allocation19], 128
    $region117: #{_sslvae_core.1} parent=1 // pred_fallthru
      _
    // Predicated region
    $region118: #{_sslvae_core.1} parent=1 // pred_check
      _
    $region119: #{_sslvae_core.1} parent=1 // pred_check_branch
      %1076 = sbr.rel (0) target = $region121
    $region120: #{_sslvae_core.1} parent=1 // pred_region
      %1078 = dma.done [#allocation19], 512
    $region121: #{_sslvae_core.1} parent=1 // pred_fallthru
      _
    // Predicated region
    $region122: #{_sslvae_core.1} parent=1 // pred_check
      _
    $region123: #{_sslvae_core.1} parent=1 // pred_check_branch
      %1080 = sbr.rel (0) target = $region125
    $region124: #{_sslvae_core.1} parent=1 // pred_region
      %1082 = dma.done [#allocation22], 512
    $region125: #{_sslvae_core.1} parent=1 // pred_fallthru
      _
    %1083 = vsyncpa [#allocation3], 1
    %1084 = vsyncpa [#allocation6], 1
    %1085 = vsyncpa [#allocation9], 1
    %1086 = vsyncpa [#allocation12], 1
    %1087 = vsyncpa [#allocation15], 1
    %1088 = vsyncpa [#allocation4], 1
    %1089 = vsyncpa [#allocation19], 1
    %1090 = vsyncpa [#allocation22], 1

</llo_original>
